<compile_context>
chip_gen: v7x
topology: tpu7x:2x2x1
jax: 0.10.0
libtpu: 0.0.40
codegen_flags: <defaults>
</compile_context>

<pallas_src>
import jax
import jax.numpy as jnp
from jax.experimental import pallas as pl
from jax.experimental.pallas import tpu as pltpu

# ---- model hyperparameters (from the PyTorch module) -----------------------
HIDDEN_DIM = 32            # lstm1 hidden size
SEQ_LEN = 5                # input_data_time_step
INPUT_DIM = 15
NUM_TIMESTEPS = 3          # decoder repeat count
OUTPUT_DIM = 6
HIDDEN2 = 12               # lstm2 hidden size
FLAT_DIM = HIDDEN_DIM * SEQ_LEN   # 160 = lstm2 input size


def _lstm_cell(x_gates, h, c, whhT, hidden, mm_dtype):
    """One PyTorch-style LSTM cell step (bias already folded into x_gates).

    x_gates : (B, 4H) f32, precomputed x_t @ W_ih^T + b_ih + b_hh
    h, c    : (B, H)  f32 state
    whhT    : (H, 4H) mm_dtype
    """
    gates = x_gates + jnp.dot(h.astype(mm_dtype), whhT,
                              preferred_element_type=jnp.float32)
    # gate math stays f32 (VPU/EUP); only matmul operands are narrowed.
    i = jax.nn.sigmoid(gates[:, 0 * hidden:1 * hidden])
    f = jax.nn.sigmoid(gates[:, 1 * hidden:2 * hidden])
    g = jnp.tanh(gates[:, 2 * hidden:3 * hidden])
    o = jax.nn.sigmoid(gates[:, 3 * hidden:4 * hidden])
    c_new = f * c + i * g
    h_new = o * jnp.tanh(c_new)
    return h_new, c_new


def seq2seq_kernel(x_ref,
                   wih1_ref, whh1_ref, b1_ref,
                   wih2_ref, whh2_ref, b2_ref,
                   wfc_ref, bfc_ref,
                   out_ref):
    mm_dtype = wih1_ref.dtype
    x_tm = x_ref[...]                                  # (SEQ_LEN, TB, INPUT_DIM) f32
    S, TB, I = x_tm.shape

    # ---------------- encoder LSTM (lstm1) ----------------
    # hoisted input projection: one big matmul, bias folded once
    x2d = x_tm.reshape(S * TB, I).astype(mm_dtype)
    xg_all = (jnp.dot(x2d, wih1_ref[...], preferred_element_type=jnp.float32)
              + b1_ref[...])                           # (S*TB, 4*HIDDEN_DIM)
    xg_all = xg_all.reshape(S, TB, 4 * HIDDEN_DIM)

    whh1T = whh1_ref[...]                              # (HIDDEN_DIM, 4*HIDDEN_DIM)
    h1 = jnp.zeros((TB, HIDDEN_DIM), jnp.float32)
    c1 = jnp.zeros((TB, HIDDEN_DIM), jnp.float32)
    hs = []
    for t in range(SEQ_LEN):                           # static unroll (5)
        h1, c1 = _lstm_cell(xg_all[t], h1, c1, whh1T, HIDDEN_DIM, mm_dtype)
        hs.append(h1)

    # flatten(seq, hidden) -> (TB, SEQ_LEN*HIDDEN_DIM), same order as torch Flatten
    flat = jnp.concatenate(hs, axis=-1)                # (TB, FLAT_DIM)

    # ---------------- decoder LSTM (lstm2) ----------------
    # input is `flat` repeated NUM_TIMESTEPS times -> x@W_ih^T is step-invariant;
    # compute it (and its bias) once.
    x2g = (jnp.dot(flat.astype(mm_dtype), wih2_ref[...],
                   preferred_element_type=jnp.float32)
           + b2_ref[...])                              # (TB, 4*HIDDEN2)

    whh2T = whh2_ref[...]                              # (HIDDEN2, 4*HIDDEN2)
    h2 = jnp.zeros((TB, HIDDEN2), jnp.float32)
    c2 = jnp.zeros((TB, HIDDEN2), jnp.float32)
    h2s = []
    for t in range(NUM_TIMESTEPS):                     # static unroll (3)
        h2, c2 = _lstm_cell(x2g, h2, c2, whh2T, HIDDEN2, mm_dtype)
        h2s.append(h2)

    # -------- FC off the recurrent critical path + single lane-dense store ----
    # wfc_ref is block_diag(W_fc^T, W_fc^T, W_fc^T): one (TB,36)@(36,18) matmul
    # applies the Linear layer to all three timesteps at once.
    h2_cat = jnp.concatenate(h2s, axis=-1)             # (TB, 3*HIDDEN2)
    y = (jnp.dot(h2_cat.astype(mm_dtype), wfc_ref[...],
                 preferred_element_type=jnp.float32)
         + bfc_ref[...])                               # (TB, 3*OUTPUT_DIM)
    out_ref[...] = y.astype(out_ref.dtype)             # one store, 18 lanes


def seq2seq_forward(x, params, *, batch_tile=None, use_bf16_matmul=True):
    """x: (B, SEQ_LEN, INPUT_DIM) float32 -> (B, NUM_TIMESTEPS, OUTPUT_DIM)."""
    B = x.shape[0]
    assert x.shape[1:] == (SEQ_LEN, INPUT_DIM), x.shape
    mm_dtype = jnp.bfloat16 if use_bf16_matmul else jnp.float32

    # batch tile: multiple of 8 (f32 sublane), capped so per-step VMEM stays tiny
    if batch_tile is None:
        batch_tile = min(256, 8 * pl.cdiv(B, 8))
    TB = int(batch_tile)
    assert TB % 8 == 0
    B_pad = TB * pl.cdiv(B, TB)
    grid = (B_pad // TB,)

    if B_pad != B:
        x = jnp.pad(x, ((0, B_pad - B), (0, 0), (0, 0)))
    # time-major layout so the encoder input projection is one big matmul
    x_tm = jnp.transpose(x, (1, 0, 2)).astype(jnp.float32)   # (SEQ_LEN, B_pad, INPUT_DIM)

    # glue: pre-transpose weights, fold the two LSTM biases together
    wih1T = params["w_ih1"].T.astype(mm_dtype)               # (15, 128)
    whh1T = params["w_hh1"].T.astype(mm_dtype)               # (32, 128)
    b1 = (params["b_ih1"] + params["b_hh1"]).reshape(1, -1).astype(jnp.float32)
    wih2T = params["w_ih2"].T.astype(mm_dtype)               # (160, 48)
    whh2T = params["w_hh2"].T.astype(mm_dtype)               # (12, 48)
    b2 = (params["b_ih2"] + params["b_hh2"]).reshape(1, -1).astype(jnp.float32)

    # block-diagonal FC weight: applies fc to all NUM_TIMESTEPS decoder states at once
    wfcT = params["w_fc"].T.astype(jnp.float32)              # (12, 6)
    wfc_bd = jnp.kron(jnp.eye(NUM_TIMESTEPS, dtype=jnp.float32),
                      wfcT).astype(mm_dtype)                 # (36, 18)
    bfc_rep = jnp.tile(params["b_fc"], NUM_TIMESTEPS).reshape(1, -1).astype(jnp.float32)

    weights = (wih1T, whh1T, b1, wih2T, whh2T, b2, wfc_bd, bfc_rep)

    x_spec = pl.BlockSpec((SEQ_LEN, TB, INPUT_DIM), lambda i: (0, i, 0))
    # constant index_map -> weights stay VMEM-resident across batch tiles
    w_specs = [pl.BlockSpec(w.shape, lambda i: (0, 0)) for w in weights]
    out_spec = pl.BlockSpec((TB, NUM_TIMESTEPS * OUTPUT_DIM), lambda i: (i, 0))

    out = pl.pallas_call(
        seq2seq_kernel,
        out_shape=jax.ShapeDtypeStruct((B_pad, NUM_TIMESTEPS * OUTPUT_DIM),
                                       jnp.float32),
        grid_spec=pltpu.PrefetchScalarGridSpec(
            num_scalar_prefetch=0,
            grid=grid,
            in_specs=[x_spec] + w_specs,
            out_specs=out_spec,
        ),
        compiler_params=pltpu.CompilerParams(
            dimension_semantics=("parallel",),   # batch axis -> megacore on v7x
        ),
    )(x_tm, *weights)

    return out[:B].reshape(B, NUM_TIMESTEPS, OUTPUT_DIM)


# ---------------------- pure-JAX reference (for checking) -------------------
def _ref_forward(x, params):
    def lstm(x_seq, w_ih, w_hh, b_ih, b_hh, hidden):
        B = x_seq.shape[0]
        h = jnp.zeros((B, hidden), jnp.float32)
        c = jnp.zeros((B, hidden), jnp.float32)
        outs = []
        for t in range(x_seq.shape[1]):
            g = x_seq[:, t, :] @ w_ih.T + h @ w_hh.T + b_ih + b_hh
            i = jax.nn.sigmoid(g[:, 0 * hidden:1 * hidden])
            f = jax.nn.sigmoid(g[:, 1 * hidden:2 * hidden])
            gg = jnp.tanh(g[:, 2 * hidden:3 * hidden])
            o = jax.nn.sigmoid(g[:, 3 * hidden:4 * hidden])
            c = f * c + i * gg
            h = o * jnp.tanh(c)
            outs.append(h)
        return jnp.stack(outs, axis=1)

    y1 = lstm(x, params["w_ih1"], params["w_hh1"],
              params["b_ih1"], params["b_hh1"], HIDDEN_DIM)     # (B, 5, 32)
    flat = y1.reshape(y1.shape[0], -1)                          # (B, 160)
    x2 = jnp.repeat(flat[:, None, :], NUM_TIMESTEPS, axis=1)    # (B, 3, 160)
    y2 = lstm(x2, params["w_ih2"], params["w_hh2"],
              params["b_ih2"], params["b_hh2"], HIDDEN2)        # (B, 3, 12)
    return y2 @ params["w_fc"].T + params["b_fc"]               # (B, 3, 6)


def _init_params(key):
    """Deterministic init mimicking PyTorch's U(-1/sqrt(H), 1/sqrt(H))."""
    ks = jax.random.split(key, 10)
    u = lambda k, shape, bound: jax.random.uniform(
        k, shape, jnp.float32, minval=-bound, maxval=bound)
    b1 = 1.0 / jnp.sqrt(HIDDEN_DIM)
    b2 = 1.0 / jnp.sqrt(HIDDEN2)
    return {
        "w_ih1": u(ks[0], (4 * HIDDEN_DIM, INPUT_DIM), b1),
        "w_hh1": u(ks[1], (4 * HIDDEN_DIM, HIDDEN_DIM), b1),
        "b_ih1": u(ks[2], (4 * HIDDEN_DIM,), b1),
        "b_hh1": u(ks[3], (4 * HIDDEN_DIM,), b1),
        "w_ih2": u(ks[4], (4 * HIDDEN2, FLAT_DIM), b2),
        "w_hh2": u(ks[5], (4 * HIDDEN2, HIDDEN2), b2),
        "b_ih2": u(ks[6], (4 * HIDDEN2,), b2),
        "b_hh2": u(ks[7], (4 * HIDDEN2,), b2),
        "w_fc": u(ks[8], (OUTPUT_DIM, HIDDEN2), b2),
        "b_fc": u(ks[9], (OUTPUT_DIM,), b2),
    }


if __name__ == "__main__":
    key = jax.random.PRNGKey(0)
    k_x, k_p = jax.random.split(key)

    B = 2
    x = jax.random.normal(k_x, (B, SEQ_LEN, INPUT_DIM), jnp.float32)
    params = _init_params(k_p)

    ref = jax.block_until_ready(_ref_forward(x, params))

    # exact-path check: f32 MXU operands must match the reference tightly
    out_f32 = jax.block_until_ready(
        seq2seq_forward(x, params, use_bf16_matmul=False))
    assert out_f32.shape == (B, NUM_TIMESTEPS, OUTPUT_DIM), out_f32.shape
    assert jnp.allclose(out_f32, ref, atol=1e-5, rtol=1e-5), (
        float(jnp.max(jnp.abs(out_f32 - ref))))

    # default fast path: bf16 MXU operands, f32 state/accumulate (relaxed tol)
    out_bf16 = jax.block_until_ready(seq2seq_forward(x, params))
    assert out_bf16.shape == (B, NUM_TIMESTEPS, OUTPUT_DIM), out_bf16.shape
    assert jnp.allclose(out_bf16, ref, atol=5e-2, rtol=5e-2), (
        float(jnp.max(jnp.abs(out_bf16 - ref))))

    print("KERNEL_OK")
</pallas_src>

<mosaic_0001>
module attributes {stable_mosaic.version = 11 : i64} {
  func.func @seq2seq_kernel(%arg0: i32, %arg1: memref<5x8x15xf32, #tpu.memory_space<vmem>>, %arg2: memref<15x128xf32, #tpu.memory_space<vmem>>, %arg3: memref<32x128xf32, #tpu.memory_space<vmem>>, %arg4: memref<1x128xf32, #tpu.memory_space<vmem>>, %arg5: memref<160x48xf32, #tpu.memory_space<vmem>>, %arg6: memref<12x48xf32, #tpu.memory_space<vmem>>, %arg7: memref<1x48xf32, #tpu.memory_space<vmem>>, %arg8: memref<36x18xf32, #tpu.memory_space<vmem>>, %arg9: memref<1x18xf32, #tpu.memory_space<vmem>>, %arg10: memref<8x18xf32, #tpu.memory_space<vmem>>) attributes {dimension_semantics = [#tpu.dimension_semantics<parallel>], iteration_bounds = array<i64: 1>, scalar_prefetch = 0 : i64, scratch_operands = 0 : i64, tpu.core_type = #tpu.core_type<tc>, window_params = [{transform_indices = @transform_0, window_bounds = array<i64: 5, 8, 15>}, {pipeline_mode = #tpu.pipeline_mode<synchronous>, transform_indices = @transform_1, window_bounds = array<i64: 15, 128>}, {pipeline_mode = #tpu.pipeline_mode<synchronous>, transform_indices = @transform_2, window_bounds = array<i64: 32, 128>}, {pipeline_mode = #tpu.pipeline_mode<synchronous>, transform_indices = @transform_3, window_bounds = array<i64: 1, 128>}, {pipeline_mode = #tpu.pipeline_mode<synchronous>, transform_indices = @transform_4, window_bounds = array<i64: 160, 48>}, {pipeline_mode = #tpu.pipeline_mode<synchronous>, transform_indices = @transform_5, window_bounds = array<i64: 12, 48>}, {pipeline_mode = #tpu.pipeline_mode<synchronous>, transform_indices = @transform_6, window_bounds = array<i64: 1, 48>}, {pipeline_mode = #tpu.pipeline_mode<synchronous>, transform_indices = @transform_7, window_bounds = array<i64: 36, 18>}, {pipeline_mode = #tpu.pipeline_mode<synchronous>, transform_indices = @transform_8, window_bounds = array<i64: 1, 18>}, {transform_indices = @transform_9, window_bounds = array<i64: 8, 18>}]} {
    %c0 = arith.constant 0 : index
    %c0_0 = arith.constant 0 : index
    %c0_1 = arith.constant 0 : index
    %0 = vector.load %arg1[%c0, %c0_0, %c0_1] : memref<5x8x15xf32, #tpu.memory_space<vmem>>, vector<5x8x15xf32>
    %1 = vector.shape_cast %0 : vector<5x8x15xf32> to vector<40x15xf32>
    %c0_2 = arith.constant 0 : index
    %c0_3 = arith.constant 0 : index
    %2 = vector.load %arg2[%c0_2, %c0_3] : memref<15x128xf32, #tpu.memory_space<vmem>>, vector<15x128xf32>
    %cst = arith.constant dense<0.000000e+00> : vector<40x128xf32>
    %3 = tpu.matmul %1, %2, %cst {dimension_numbers = #tpu.dot_dimension_numbers<[1], [0], [0], [1], [0, 0, 1, 1], [], []>} : vector<40x15xf32>, vector<15x128xf32>, vector<40x128xf32> -> vector<40x128xf32>
    %c0_4 = arith.constant 0 : index
    %c0_5 = arith.constant 0 : index
    %4 = vector.load %arg4[%c0_4, %c0_5] : memref<1x128xf32, #tpu.memory_space<vmem>>, vector<1x128xf32>
    %5 = vector.broadcast %4 : vector<1x128xf32> to vector<40x128xf32>
    %6 = arith.addf %3, %5 : vector<40x128xf32>
    %7 = vector.shape_cast %6 : vector<40x128xf32> to vector<5x8x128xf32>
    %c0_6 = arith.constant 0 : index
    %c0_7 = arith.constant 0 : index
    %8 = vector.load %arg3[%c0_6, %c0_7] : memref<32x128xf32, #tpu.memory_space<vmem>>, vector<32x128xf32>
    %cst_8 = arith.constant 0.000000e+00 : f32
    %9 = vector.broadcast %cst_8 : f32 to vector<8x32xf32>
    %cst_9 = arith.constant 0.000000e+00 : f32
    %10 = vector.broadcast %cst_9 : f32 to vector<8x32xf32>
    %11 = vector.extract_strided_slice %7 {offsets = [0, 0, 0], sizes = [1, 8, 128], strides = [1, 1, 1]} : vector<5x8x128xf32> to vector<1x8x128xf32>
    %12 = vector.shape_cast %11 : vector<1x8x128xf32> to vector<8x128xf32>
    %cst_10 = arith.constant dense<0.000000e+00> : vector<8x128xf32>
    %13 = tpu.matmul %9, %8, %cst_10 {dimension_numbers = #tpu.dot_dimension_numbers<[1], [0], [0], [1], [0, 0, 1, 1], [], []>} : vector<8x32xf32>, vector<32x128xf32>, vector<8x128xf32> -> vector<8x128xf32>
    %14 = arith.addf %12, %13 : vector<8x128xf32>
    %15 = vector.extract_strided_slice %14 {offsets = [0, 0], sizes = [8, 32], strides = [1, 1]} : vector<8x128xf32> to vector<8x32xf32>
    %16 = arith.negf %15 : vector<8x32xf32>
    %17 = math.exp %16 : vector<8x32xf32>
    %cst_11 = arith.constant 1.000000e+00 : f32
    %18 = vector.broadcast %cst_11 : f32 to vector<8x32xf32>
    %19 = arith.addf %18, %17 : vector<8x32xf32>
    %20 = arith.divf %18, %19 : vector<8x32xf32>
    %21 = vector.extract_strided_slice %14 {offsets = [0, 32], sizes = [8, 32], strides = [1, 1]} : vector<8x128xf32> to vector<8x32xf32>
    %22 = arith.negf %21 : vector<8x32xf32>
    %23 = math.exp %22 : vector<8x32xf32>
    %cst_12 = arith.constant 1.000000e+00 : f32
    %24 = vector.broadcast %cst_12 : f32 to vector<8x32xf32>
    %25 = arith.addf %24, %23 : vector<8x32xf32>
    %26 = arith.divf %24, %25 : vector<8x32xf32>
    %27 = vector.extract_strided_slice %14 {offsets = [0, 64], sizes = [8, 32], strides = [1, 1]} : vector<8x128xf32> to vector<8x32xf32>
    %28 = math.tanh %27 : vector<8x32xf32>
    %29 = vector.extract_strided_slice %14 {offsets = [0, 96], sizes = [8, 32], strides = [1, 1]} : vector<8x128xf32> to vector<8x32xf32>
    %30 = arith.negf %29 : vector<8x32xf32>
    %31 = math.exp %30 : vector<8x32xf32>
    %cst_13 = arith.constant 1.000000e+00 : f32
    %32 = vector.broadcast %cst_13 : f32 to vector<8x32xf32>
    %33 = arith.addf %32, %31 : vector<8x32xf32>
    %34 = arith.divf %32, %33 : vector<8x32xf32>
    %35 = arith.mulf %26, %10 : vector<8x32xf32>
    %36 = arith.mulf %20, %28 : vector<8x32xf32>
    %37 = arith.addf %35, %36 : vector<8x32xf32>
    %38 = math.tanh %37 : vector<8x32xf32>
    %39 = arith.mulf %34, %38 : vector<8x32xf32>
    %40 = vector.extract_strided_slice %7 {offsets = [1, 0, 0], sizes = [1, 8, 128], strides = [1, 1, 1]} : vector<5x8x128xf32> to vector<1x8x128xf32>
    %41 = vector.shape_cast %40 : vector<1x8x128xf32> to vector<8x128xf32>
    %cst_14 = arith.constant dense<0.000000e+00> : vector<8x128xf32>
    %42 = tpu.matmul %39, %8, %cst_14 {dimension_numbers = #tpu.dot_dimension_numbers<[1], [0], [0], [1], [0, 0, 1, 1], [], []>} : vector<8x32xf32>, vector<32x128xf32>, vector<8x128xf32> -> vector<8x128xf32>
    %43 = arith.addf %41, %42 : vector<8x128xf32>
    %44 = vector.extract_strided_slice %43 {offsets = [0, 0], sizes = [8, 32], strides = [1, 1]} : vector<8x128xf32> to vector<8x32xf32>
    %45 = arith.negf %44 : vector<8x32xf32>
    %46 = math.exp %45 : vector<8x32xf32>
    %cst_15 = arith.constant 1.000000e+00 : f32
    %47 = vector.broadcast %cst_15 : f32 to vector<8x32xf32>
    %48 = arith.addf %47, %46 : vector<8x32xf32>
    %49 = arith.divf %47, %48 : vector<8x32xf32>
    %50 = vector.extract_strided_slice %43 {offsets = [0, 32], sizes = [8, 32], strides = [1, 1]} : vector<8x128xf32> to vector<8x32xf32>
    %51 = arith.negf %50 : vector<8x32xf32>
    %52 = math.exp %51 : vector<8x32xf32>
    %cst_16 = arith.constant 1.000000e+00 : f32
    %53 = vector.broadcast %cst_16 : f32 to vector<8x32xf32>
    %54 = arith.addf %53, %52 : vector<8x32xf32>
    %55 = arith.divf %53, %54 : vector<8x32xf32>
    %56 = vector.extract_strided_slice %43 {offsets = [0, 64], sizes = [8, 32], strides = [1, 1]} : vector<8x128xf32> to vector<8x32xf32>
    %57 = math.tanh %56 : vector<8x32xf32>
    %58 = vector.extract_strided_slice %43 {offsets = [0, 96], sizes = [8, 32], strides = [1, 1]} : vector<8x128xf32> to vector<8x32xf32>
    %59 = arith.negf %58 : vector<8x32xf32>
    %60 = math.exp %59 : vector<8x32xf32>
    %cst_17 = arith.constant 1.000000e+00 : f32
    %61 = vector.broadcast %cst_17 : f32 to vector<8x32xf32>
    %62 = arith.addf %61, %60 : vector<8x32xf32>
    %63 = arith.divf %61, %62 : vector<8x32xf32>
    %64 = arith.mulf %55, %37 : vector<8x32xf32>
    %65 = arith.mulf %49, %57 : vector<8x32xf32>
    %66 = arith.addf %64, %65 : vector<8x32xf32>
    %67 = math.tanh %66 : vector<8x32xf32>
    %68 = arith.mulf %63, %67 : vector<8x32xf32>
    %69 = vector.extract_strided_slice %7 {offsets = [2, 0, 0], sizes = [1, 8, 128], strides = [1, 1, 1]} : vector<5x8x128xf32> to vector<1x8x128xf32>
    %70 = vector.shape_cast %69 : vector<1x8x128xf32> to vector<8x128xf32>
    %cst_18 = arith.constant dense<0.000000e+00> : vector<8x128xf32>
    %71 = tpu.matmul %68, %8, %cst_18 {dimension_numbers = #tpu.dot_dimension_numbers<[1], [0], [0], [1], [0, 0, 1, 1], [], []>} : vector<8x32xf32>, vector<32x128xf32>, vector<8x128xf32> -> vector<8x128xf32>
    %72 = arith.addf %70, %71 : vector<8x128xf32>
    %73 = vector.extract_strided_slice %72 {offsets = [0, 0], sizes = [8, 32], strides = [1, 1]} : vector<8x128xf32> to vector<8x32xf32>
    %74 = arith.negf %73 : vector<8x32xf32>
    %75 = math.exp %74 : vector<8x32xf32>
    %cst_19 = arith.constant 1.000000e+00 : f32
    %76 = vector.broadcast %cst_19 : f32 to vector<8x32xf32>
    %77 = arith.addf %76, %75 : vector<8x32xf32>
    %78 = arith.divf %76, %77 : vector<8x32xf32>
    %79 = vector.extract_strided_slice %72 {offsets = [0, 32], sizes = [8, 32], strides = [1, 1]} : vector<8x128xf32> to vector<8x32xf32>
    %80 = arith.negf %79 : vector<8x32xf32>
    %81 = math.exp %80 : vector<8x32xf32>
    %cst_20 = arith.constant 1.000000e+00 : f32
    %82 = vector.broadcast %cst_20 : f32 to vector<8x32xf32>
    %83 = arith.addf %82, %81 : vector<8x32xf32>
    %84 = arith.divf %82, %83 : vector<8x32xf32>
    %85 = vector.extract_strided_slice %72 {offsets = [0, 64], sizes = [8, 32], strides = [1, 1]} : vector<8x128xf32> to vector<8x32xf32>
    %86 = math.tanh %85 : vector<8x32xf32>
    %87 = vector.extract_strided_slice %72 {offsets = [0, 96], sizes = [8, 32], strides = [1, 1]} : vector<8x128xf32> to vector<8x32xf32>
    %88 = arith.negf %87 : vector<8x32xf32>
    %89 = math.exp %88 : vector<8x32xf32>
    %cst_21 = arith.constant 1.000000e+00 : f32
    %90 = vector.broadcast %cst_21 : f32 to vector<8x32xf32>
    %91 = arith.addf %90, %89 : vector<8x32xf32>
    %92 = arith.divf %90, %91 : vector<8x32xf32>
    %93 = arith.mulf %84, %66 : vector<8x32xf32>
    %94 = arith.mulf %78, %86 : vector<8x32xf32>
    %95 = arith.addf %93, %94 : vector<8x32xf32>
    %96 = math.tanh %95 : vector<8x32xf32>
    %97 = arith.mulf %92, %96 : vector<8x32xf32>
    %98 = vector.extract_strided_slice %7 {offsets = [3, 0, 0], sizes = [1, 8, 128], strides = [1, 1, 1]} : vector<5x8x128xf32> to vector<1x8x128xf32>
    %99 = vector.shape_cast %98 : vector<1x8x128xf32> to vector<8x128xf32>
    %cst_22 = arith.constant dense<0.000000e+00> : vector<8x128xf32>
    %100 = tpu.matmul %97, %8, %cst_22 {dimension_numbers = #tpu.dot_dimension_numbers<[1], [0], [0], [1], [0, 0, 1, 1], [], []>} : vector<8x32xf32>, vector<32x128xf32>, vector<8x128xf32> -> vector<8x128xf32>
    %101 = arith.addf %99, %100 : vector<8x128xf32>
    %102 = vector.extract_strided_slice %101 {offsets = [0, 0], sizes = [8, 32], strides = [1, 1]} : vector<8x128xf32> to vector<8x32xf32>
    %103 = arith.negf %102 : vector<8x32xf32>
    %104 = math.exp %103 : vector<8x32xf32>
    %cst_23 = arith.constant 1.000000e+00 : f32
    %105 = vector.broadcast %cst_23 : f32 to vector<8x32xf32>
    %106 = arith.addf %105, %104 : vector<8x32xf32>
    %107 = arith.divf %105, %106 : vector<8x32xf32>
    %108 = vector.extract_strided_slice %101 {offsets = [0, 32], sizes = [8, 32], strides = [1, 1]} : vector<8x128xf32> to vector<8x32xf32>
    %109 = arith.negf %108 : vector<8x32xf32>
    %110 = math.exp %109 : vector<8x32xf32>
    %cst_24 = arith.constant 1.000000e+00 : f32
    %111 = vector.broadcast %cst_24 : f32 to vector<8x32xf32>
    %112 = arith.addf %111, %110 : vector<8x32xf32>
    %113 = arith.divf %111, %112 : vector<8x32xf32>
    %114 = vector.extract_strided_slice %101 {offsets = [0, 64], sizes = [8, 32], strides = [1, 1]} : vector<8x128xf32> to vector<8x32xf32>
    %115 = math.tanh %114 : vector<8x32xf32>
    %116 = vector.extract_strided_slice %101 {offsets = [0, 96], sizes = [8, 32], strides = [1, 1]} : vector<8x128xf32> to vector<8x32xf32>
    %117 = arith.negf %116 : vector<8x32xf32>
    %118 = math.exp %117 : vector<8x32xf32>
    %cst_25 = arith.constant 1.000000e+00 : f32
    %119 = vector.broadcast %cst_25 : f32 to vector<8x32xf32>
    %120 = arith.addf %119, %118 : vector<8x32xf32>
    %121 = arith.divf %119, %120 : vector<8x32xf32>
    %122 = arith.mulf %113, %95 : vector<8x32xf32>
    %123 = arith.mulf %107, %115 : vector<8x32xf32>
    %124 = arith.addf %122, %123 : vector<8x32xf32>
    %125 = math.tanh %124 : vector<8x32xf32>
    %126 = arith.mulf %121, %125 : vector<8x32xf32>
    %127 = vector.extract_strided_slice %7 {offsets = [4, 0, 0], sizes = [1, 8, 128], strides = [1, 1, 1]} : vector<5x8x128xf32> to vector<1x8x128xf32>
    %128 = vector.shape_cast %127 : vector<1x8x128xf32> to vector<8x128xf32>
    %cst_26 = arith.constant dense<0.000000e+00> : vector<8x128xf32>
    %129 = tpu.matmul %126, %8, %cst_26 {dimension_numbers = #tpu.dot_dimension_numbers<[1], [0], [0], [1], [0, 0, 1, 1], [], []>} : vector<8x32xf32>, vector<32x128xf32>, vector<8x128xf32> -> vector<8x128xf32>
    %130 = arith.addf %128, %129 : vector<8x128xf32>
    %131 = vector.extract_strided_slice %130 {offsets = [0, 0], sizes = [8, 32], strides = [1, 1]} : vector<8x128xf32> to vector<8x32xf32>
    %132 = arith.negf %131 : vector<8x32xf32>
    %133 = math.exp %132 : vector<8x32xf32>
    %cst_27 = arith.constant 1.000000e+00 : f32
    %134 = vector.broadcast %cst_27 : f32 to vector<8x32xf32>
    %135 = arith.addf %134, %133 : vector<8x32xf32>
    %136 = arith.divf %134, %135 : vector<8x32xf32>
    %137 = vector.extract_strided_slice %130 {offsets = [0, 32], sizes = [8, 32], strides = [1, 1]} : vector<8x128xf32> to vector<8x32xf32>
    %138 = arith.negf %137 : vector<8x32xf32>
    %139 = math.exp %138 : vector<8x32xf32>
    %cst_28 = arith.constant 1.000000e+00 : f32
    %140 = vector.broadcast %cst_28 : f32 to vector<8x32xf32>
    %141 = arith.addf %140, %139 : vector<8x32xf32>
    %142 = arith.divf %140, %141 : vector<8x32xf32>
    %143 = vector.extract_strided_slice %130 {offsets = [0, 64], sizes = [8, 32], strides = [1, 1]} : vector<8x128xf32> to vector<8x32xf32>
    %144 = math.tanh %143 : vector<8x32xf32>
    %145 = vector.extract_strided_slice %130 {offsets = [0, 96], sizes = [8, 32], strides = [1, 1]} : vector<8x128xf32> to vector<8x32xf32>
    %146 = arith.negf %145 : vector<8x32xf32>
    %147 = math.exp %146 : vector<8x32xf32>
    %cst_29 = arith.constant 1.000000e+00 : f32
    %148 = vector.broadcast %cst_29 : f32 to vector<8x32xf32>
    %149 = arith.addf %148, %147 : vector<8x32xf32>
    %150 = arith.divf %148, %149 : vector<8x32xf32>
    %151 = arith.mulf %142, %124 : vector<8x32xf32>
    %152 = arith.mulf %136, %144 : vector<8x32xf32>
    %153 = arith.addf %151, %152 : vector<8x32xf32>
    %154 = math.tanh %153 : vector<8x32xf32>
    %155 = arith.mulf %150, %154 : vector<8x32xf32>
    %156 = tpu.concatenate %39, %68, %97, %126, %155 in 1 : vector<8x32xf32>, vector<8x32xf32>, vector<8x32xf32>, vector<8x32xf32>, vector<8x32xf32> -> vector<8x160xf32>
    %c0_30 = arith.constant 0 : index
    %c0_31 = arith.constant 0 : index
    %157 = vector.load %arg5[%c0_30, %c0_31] : memref<160x48xf32, #tpu.memory_space<vmem>>, vector<160x48xf32>
    %cst_32 = arith.constant dense<0.000000e+00> : vector<8x48xf32>
    %158 = tpu.matmul %156, %157, %cst_32 {dimension_numbers = #tpu.dot_dimension_numbers<[1], [0], [0], [1], [0, 0, 1, 1], [], []>} : vector<8x160xf32>, vector<160x48xf32>, vector<8x48xf32> -> vector<8x48xf32>
    %c0_33 = arith.constant 0 : index
    %c0_34 = arith.constant 0 : index
    %159 = vector.load %arg7[%c0_33, %c0_34] : memref<1x48xf32, #tpu.memory_space<vmem>>, vector<1x48xf32>
    %160 = vector.broadcast %159 : vector<1x48xf32> to vector<8x48xf32>
    %161 = arith.addf %158, %160 : vector<8x48xf32>
    %c0_35 = arith.constant 0 : index
    %c0_36 = arith.constant 0 : index
    %162 = vector.load %arg6[%c0_35, %c0_36] : memref<12x48xf32, #tpu.memory_space<vmem>>, vector<12x48xf32>
    %cst_37 = arith.constant 0.000000e+00 : f32
    %163 = vector.broadcast %cst_37 : f32 to vector<8x12xf32>
    %cst_38 = arith.constant 0.000000e+00 : f32
    %164 = vector.broadcast %cst_38 : f32 to vector<8x12xf32>
    %cst_39 = arith.constant dense<0.000000e+00> : vector<8x48xf32>
    %165 = tpu.matmul %163, %162, %cst_39 {dimension_numbers = #tpu.dot_dimension_numbers<[1], [0], [0], [1], [0, 0, 1, 1], [], []>} : vector<8x12xf32>, vector<12x48xf32>, vector<8x48xf32> -> vector<8x48xf32>
    %166 = arith.addf %161, %165 : vector<8x48xf32>
    %167 = vector.extract_strided_slice %166 {offsets = [0, 0], sizes = [8, 12], strides = [1, 1]} : vector<8x48xf32> to vector<8x12xf32>
    %168 = arith.negf %167 : vector<8x12xf32>
    %169 = math.exp %168 : vector<8x12xf32>
    %cst_40 = arith.constant 1.000000e+00 : f32
    %170 = vector.broadcast %cst_40 : f32 to vector<8x12xf32>
    %171 = arith.addf %170, %169 : vector<8x12xf32>
    %172 = arith.divf %170, %171 : vector<8x12xf32>
    %173 = vector.extract_strided_slice %166 {offsets = [0, 12], sizes = [8, 12], strides = [1, 1]} : vector<8x48xf32> to vector<8x12xf32>
    %174 = arith.negf %173 : vector<8x12xf32>
    %175 = math.exp %174 : vector<8x12xf32>
    %cst_41 = arith.constant 1.000000e+00 : f32
    %176 = vector.broadcast %cst_41 : f32 to vector<8x12xf32>
    %177 = arith.addf %176, %175 : vector<8x12xf32>
    %178 = arith.divf %176, %177 : vector<8x12xf32>
    %179 = vector.extract_strided_slice %166 {offsets = [0, 24], sizes = [8, 12], strides = [1, 1]} : vector<8x48xf32> to vector<8x12xf32>
    %180 = math.tanh %179 : vector<8x12xf32>
    %181 = vector.extract_strided_slice %166 {offsets = [0, 36], sizes = [8, 12], strides = [1, 1]} : vector<8x48xf32> to vector<8x12xf32>
    %182 = arith.negf %181 : vector<8x12xf32>
    %183 = math.exp %182 : vector<8x12xf32>
    %cst_42 = arith.constant 1.000000e+00 : f32
    %184 = vector.broadcast %cst_42 : f32 to vector<8x12xf32>
    %185 = arith.addf %184, %183 : vector<8x12xf32>
    %186 = arith.divf %184, %185 : vector<8x12xf32>
    %187 = arith.mulf %178, %164 : vector<8x12xf32>
    %188 = arith.mulf %172, %180 : vector<8x12xf32>
    %189 = arith.addf %187, %188 : vector<8x12xf32>
    %190 = math.tanh %189 : vector<8x12xf32>
    %191 = arith.mulf %186, %190 : vector<8x12xf32>
    %cst_43 = arith.constant dense<0.000000e+00> : vector<8x48xf32>
    %192 = tpu.matmul %191, %162, %cst_43 {dimension_numbers = #tpu.dot_dimension_numbers<[1], [0], [0], [1], [0, 0, 1, 1], [], []>} : vector<8x12xf32>, vector<12x48xf32>, vector<8x48xf32> -> vector<8x48xf32>
    %193 = arith.addf %161, %192 : vector<8x48xf32>
    %194 = vector.extract_strided_slice %193 {offsets = [0, 0], sizes = [8, 12], strides = [1, 1]} : vector<8x48xf32> to vector<8x12xf32>
    %195 = arith.negf %194 : vector<8x12xf32>
    %196 = math.exp %195 : vector<8x12xf32>
    %cst_44 = arith.constant 1.000000e+00 : f32
    %197 = vector.broadcast %cst_44 : f32 to vector<8x12xf32>
    %198 = arith.addf %197, %196 : vector<8x12xf32>
    %199 = arith.divf %197, %198 : vector<8x12xf32>
    %200 = vector.extract_strided_slice %193 {offsets = [0, 12], sizes = [8, 12], strides = [1, 1]} : vector<8x48xf32> to vector<8x12xf32>
    %201 = arith.negf %200 : vector<8x12xf32>
    %202 = math.exp %201 : vector<8x12xf32>
    %cst_45 = arith.constant 1.000000e+00 : f32
    %203 = vector.broadcast %cst_45 : f32 to vector<8x12xf32>
    %204 = arith.addf %203, %202 : vector<8x12xf32>
    %205 = arith.divf %203, %204 : vector<8x12xf32>
    %206 = vector.extract_strided_slice %193 {offsets = [0, 24], sizes = [8, 12], strides = [1, 1]} : vector<8x48xf32> to vector<8x12xf32>
    %207 = math.tanh %206 : vector<8x12xf32>
    %208 = vector.extract_strided_slice %193 {offsets = [0, 36], sizes = [8, 12], strides = [1, 1]} : vector<8x48xf32> to vector<8x12xf32>
    %209 = arith.negf %208 : vector<8x12xf32>
    %210 = math.exp %209 : vector<8x12xf32>
    %cst_46 = arith.constant 1.000000e+00 : f32
    %211 = vector.broadcast %cst_46 : f32 to vector<8x12xf32>
    %212 = arith.addf %211, %210 : vector<8x12xf32>
    %213 = arith.divf %211, %212 : vector<8x12xf32>
    %214 = arith.mulf %205, %189 : vector<8x12xf32>
    %215 = arith.mulf %199, %207 : vector<8x12xf32>
    %216 = arith.addf %214, %215 : vector<8x12xf32>
    %217 = math.tanh %216 : vector<8x12xf32>
    %218 = arith.mulf %213, %217 : vector<8x12xf32>
    %cst_47 = arith.constant dense<0.000000e+00> : vector<8x48xf32>
    %219 = tpu.matmul %218, %162, %cst_47 {dimension_numbers = #tpu.dot_dimension_numbers<[1], [0], [0], [1], [0, 0, 1, 1], [], []>} : vector<8x12xf32>, vector<12x48xf32>, vector<8x48xf32> -> vector<8x48xf32>
    %220 = arith.addf %161, %219 : vector<8x48xf32>
    %221 = vector.extract_strided_slice %220 {offsets = [0, 0], sizes = [8, 12], strides = [1, 1]} : vector<8x48xf32> to vector<8x12xf32>
    %222 = arith.negf %221 : vector<8x12xf32>
    %223 = math.exp %222 : vector<8x12xf32>
    %cst_48 = arith.constant 1.000000e+00 : f32
    %224 = vector.broadcast %cst_48 : f32 to vector<8x12xf32>
    %225 = arith.addf %224, %223 : vector<8x12xf32>
    %226 = arith.divf %224, %225 : vector<8x12xf32>
    %227 = vector.extract_strided_slice %220 {offsets = [0, 12], sizes = [8, 12], strides = [1, 1]} : vector<8x48xf32> to vector<8x12xf32>
    %228 = arith.negf %227 : vector<8x12xf32>
    %229 = math.exp %228 : vector<8x12xf32>
    %cst_49 = arith.constant 1.000000e+00 : f32
    %230 = vector.broadcast %cst_49 : f32 to vector<8x12xf32>
    %231 = arith.addf %230, %229 : vector<8x12xf32>
    %232 = arith.divf %230, %231 : vector<8x12xf32>
    %233 = vector.extract_strided_slice %220 {offsets = [0, 24], sizes = [8, 12], strides = [1, 1]} : vector<8x48xf32> to vector<8x12xf32>
    %234 = math.tanh %233 : vector<8x12xf32>
    %235 = vector.extract_strided_slice %220 {offsets = [0, 36], sizes = [8, 12], strides = [1, 1]} : vector<8x48xf32> to vector<8x12xf32>
    %236 = arith.negf %235 : vector<8x12xf32>
    %237 = math.exp %236 : vector<8x12xf32>
    %cst_50 = arith.constant 1.000000e+00 : f32
    %238 = vector.broadcast %cst_50 : f32 to vector<8x12xf32>
    %239 = arith.addf %238, %237 : vector<8x12xf32>
    %240 = arith.divf %238, %239 : vector<8x12xf32>
    %241 = arith.mulf %232, %216 : vector<8x12xf32>
    %242 = arith.mulf %226, %234 : vector<8x12xf32>
    %243 = arith.addf %241, %242 : vector<8x12xf32>
    %244 = math.tanh %243 : vector<8x12xf32>
    %245 = arith.mulf %240, %244 : vector<8x12xf32>
    %246 = tpu.concatenate %191, %218, %245 in 1 : vector<8x12xf32>, vector<8x12xf32>, vector<8x12xf32> -> vector<8x36xf32>
    %c0_51 = arith.constant 0 : index
    %c0_52 = arith.constant 0 : index
    %247 = vector.load %arg8[%c0_51, %c0_52] : memref<36x18xf32, #tpu.memory_space<vmem>>, vector<36x18xf32>
    %cst_53 = arith.constant dense<0.000000e+00> : vector<8x18xf32>
    %248 = tpu.matmul %246, %247, %cst_53 {dimension_numbers = #tpu.dot_dimension_numbers<[1], [0], [0], [1], [0, 0, 1, 1], [], []>} : vector<8x36xf32>, vector<36x18xf32>, vector<8x18xf32> -> vector<8x18xf32>
    %c0_54 = arith.constant 0 : index
    %c0_55 = arith.constant 0 : index
    %249 = vector.load %arg9[%c0_54, %c0_55] : memref<1x18xf32, #tpu.memory_space<vmem>>, vector<1x18xf32>
    %250 = vector.broadcast %249 : vector<1x18xf32> to vector<8x18xf32>
    %251 = arith.addf %248, %250 : vector<8x18xf32>
    %c0_56 = arith.constant 0 : index
    %c0_57 = arith.constant 0 : index
    %252 = vector.load %arg10[%c0_56, %c0_57] : memref<8x18xf32, #tpu.memory_space<vmem>>, vector<8x18xf32>
    tpu.vector_store %arg10[%c0_56, %c0_57], %251 {strides = array<i32>} : memref<8x18xf32, #tpu.memory_space<vmem>>, vector<8x18xf32>,
    return
  }
  func.func @transform_0(%arg0: i32) -> (i32, i32, i32) {
    %c0_i32 = arith.constant 0 : i32
    %c0_i32_0 = arith.constant 0 : i32
    %c0_i32_1 = arith.constant 0 : i32
    return %c0_i32, %arg0, %c0_i32_0 : i32, i32, i32
  }
  func.func @transform_1(%arg0: i32) -> (i32, i32) {
    %c0_i32 = arith.constant 0 : i32
    %c0_i32_0 = arith.constant 0 : i32
    %c0_i32_1 = arith.constant 0 : i32
    return %c0_i32, %c0_i32_0 : i32, i32
  }
  func.func @transform_2(%arg0: i32) -> (i32, i32) {
    %c0_i32 = arith.constant 0 : i32
    %c0_i32_0 = arith.constant 0 : i32
    %c0_i32_1 = arith.constant 0 : i32
    return %c0_i32, %c0_i32_0 : i32, i32
  }
  func.func @transform_3(%arg0: i32) -> (i32, i32) {
    %c0_i32 = arith.constant 0 : i32
    %c0_i32_0 = arith.constant 0 : i32
    %c0_i32_1 = arith.constant 0 : i32
    return %c0_i32, %c0_i32_0 : i32, i32
  }
  func.func @transform_4(%arg0: i32) -> (i32, i32) {
    %c0_i32 = arith.constant 0 : i32
    %c0_i32_0 = arith.constant 0 : i32
    %c0_i32_1 = arith.constant 0 : i32
    return %c0_i32, %c0_i32_0 : i32, i32
  }
  func.func @transform_5(%arg0: i32) -> (i32, i32) {
    %c0_i32 = arith.constant 0 : i32
    %c0_i32_0 = arith.constant 0 : i32
    %c0_i32_1 = arith.constant 0 : i32
    return %c0_i32, %c0_i32_0 : i32, i32
  }
  func.func @transform_6(%arg0: i32) -> (i32, i32) {
    %c0_i32 = arith.constant 0 : i32
    %c0_i32_0 = arith.constant 0 : i32
    %c0_i32_1 = arith.constant 0 : i32
    return %c0_i32, %c0_i32_0 : i32, i32
  }
  func.func @transform_7(%arg0: i32) -> (i32, i32) {
    %c0_i32 = arith.constant 0 : i32
    %c0_i32_0 = arith.constant 0 : i32
    %c0_i32_1 = arith.constant 0 : i32
    return %c0_i32, %c0_i32_0 : i32, i32
  }
  func.func @transform_8(%arg0: i32) -> (i32, i32) {
    %c0_i32 = arith.constant 0 : i32
    %c0_i32_0 = arith.constant 0 : i32
    %c0_i32_1 = arith.constant 0 : i32
    return %c0_i32, %c0_i32_0 : i32, i32
  }
  func.func @transform_9(%arg0: i32) -> (i32, i32) {
    %c0_i32 = arith.constant 0 : i32
    %c0_i32_0 = arith.constant 0 : i32
    return %arg0, %c0_i32 : i32, i32
  }
}

</mosaic_0001>

<llo_original>
// kernel: tpu_custom_call.1
$region0: #{tpu_custom_call.1}
  #allocation0 [shape = 'u32[]', space=smem, size = 0x4, offset = 0x4, fixed_abs, tag = 'smem constant byte address 0x4 - core index']
  #allocation1 [shape = 'u32[144,128]{1,0:T(1,128)}', space=vmem, size = 0x12000, scoped, tag = 'internal scratch']
  %s0 = inlined_call_operand.vmem [shape: f32[5,8,15], index: 0, kind: input, shape index: {}]
  %s1 = inlined_call_operand.vmem [shape: f32[15,128], index: 1, kind: input, shape index: {}]
  %s2 = inlined_call_operand.vmem [shape: f32[32,128], index: 2, kind: input, shape index: {}]
  %s3 = inlined_call_operand.vmem [shape: f32[1,128], index: 3, kind: input, shape index: {}]
  %s4 = inlined_call_operand.vmem [shape: f32[160,48], index: 4, kind: input, shape index: {}]
  %s5 = inlined_call_operand.vmem [shape: f32[12,48], index: 5, kind: input, shape index: {}]
  %s6 = inlined_call_operand.vmem [shape: f32[1,48], index: 6, kind: input, shape index: {}]
  %s7 = inlined_call_operand.vmem [shape: f32[36,18], index: 7, kind: input, shape index: {}]
  %s8 = inlined_call_operand.vmem [shape: f32[1,18], index: 8, kind: input, shape index: {}]
  %s9 = inlined_call_operand.hbm [shape: f32[8,18], index: 9, kind: output, shape index: {}]
  %s10 = sld [smem:[#allocation0]]
  $region46: #{tpu_custom_call.1} parent=0
    _
  %s12 = ssub.s32 1, %s10
  %s13 = scalar_select 0, %s12, %s10
  $region1: #{tpu_custom_call.1} parent=0
    #allocation2 [shape = 'u8[4096]{0}', space=vmem, size = 0x1000, scoped, tag = 'output window, operand 0, single buffered']
    #allocation3 [shape = 's32[1]{0}', space=sflag, size = 0x4, scoped, tag = 'scoped memory for tpu_custom_call.1']
    %14 = vsyncpa [#allocation3], 0
    // Predicated region
    $region2: #{tpu_custom_call.1} parent=1 // pred_check
      _
    $region3: #{tpu_custom_call.1} parent=1 // pred_check_branch
      %16 = sbr.rel (0) target = $region5
    $region4: #{tpu_custom_call.1} parent=1 // pred_region
      _
    $region5: #{tpu_custom_call.1} parent=1 // pred_fallthru
      _
    // Predicated region
    $region6: #{tpu_custom_call.1} parent=1 // pred_check
      _
    $region7: #{tpu_custom_call.1} parent=1 // pred_check_branch
      %18 = sbr.rel (0) target = $region9
    $region8: #{tpu_custom_call.1} parent=1 // pred_region
      _
    $region9: #{tpu_custom_call.1} parent=1 // pred_fallthru
      _
    // Predicated region
    $region10: #{tpu_custom_call.1} parent=1 // pred_check
      _
    $region11: #{tpu_custom_call.1} parent=1 // pred_check_branch
      %20 = sbr.rel (0) target = $region13
    $region12: #{tpu_custom_call.1} parent=1 // pred_region
      _
    $region13: #{tpu_custom_call.1} parent=1 // pred_fallthru
      _
    // Predicated region
    $region14: #{tpu_custom_call.1} parent=1 // pred_check
      _
    $region15: #{tpu_custom_call.1} parent=1 // pred_check_branch
      %22 = sbr.rel (0) target = $region17
    $region16: #{tpu_custom_call.1} parent=1 // pred_region
      _
    $region17: #{tpu_custom_call.1} parent=1 // pred_fallthru
      _
    // Predicated region
    $region18: #{tpu_custom_call.1} parent=1 // pred_check
      _
    $region19: #{tpu_custom_call.1} parent=1 // pred_check_branch
      %24 = sbr.rel (0) target = $region21
    $region20: #{tpu_custom_call.1} parent=1 // pred_region
      _
    $region21: #{tpu_custom_call.1} parent=1 // pred_fallthru
      _
    // Predicated region
    $region22: #{tpu_custom_call.1} parent=1 // pred_check
      _
    $region23: #{tpu_custom_call.1} parent=1 // pred_check_branch
      %26 = sbr.rel (0) target = $region25
    $region24: #{tpu_custom_call.1} parent=1 // pred_region
      _
    $region25: #{tpu_custom_call.1} parent=1 // pred_fallthru
      _
    // Predicated region
    $region26: #{tpu_custom_call.1} parent=1 // pred_check
      _
    $region27: #{tpu_custom_call.1} parent=1 // pred_check_branch
      %28 = sbr.rel (0) target = $region29
    $region28: #{tpu_custom_call.1} parent=1 // pred_region
      _
    $region29: #{tpu_custom_call.1} parent=1 // pred_fallthru
      _
    // Predicated region
    $region30: #{tpu_custom_call.1} parent=1 // pred_check
      _
    $region31: #{tpu_custom_call.1} parent=1 // pred_check_branch
      %30 = sbr.rel (0) target = $region33
    $region32: #{tpu_custom_call.1} parent=1 // pred_region
      _
    $region33: #{tpu_custom_call.1} parent=1 // pred_fallthru
      _
    // Predicated region
    $region34: #{tpu_custom_call.1} parent=1 // pred_check
      _
    $region35: #{tpu_custom_call.1} parent=1 // pred_check_branch
      %32 = sbr.rel (0) target = $region37
    $region36: #{tpu_custom_call.1} parent=1 // pred_region
      _
    $region37: #{tpu_custom_call.1} parent=1 // pred_fallthru
      _
    %v33 = vld [vmem:[%s0] sm:$0xff]
    %v34 = vld [vmem:[%s0 + $0x8] sm:$0xff]
    %v35 = vld [vmem:[%s0 + $0x10] sm:$0xff]
    %v36 = vld [vmem:[%s0 + $0x18] sm:$0xff]
    %v37 = vld [vmem:[%s0 + $0x20] sm:$0xff]
    %v38 = vld [vmem:[%s1] sm:$0xff]
    %v39 = vld [vmem:[%s1 + $0x8] sm:$0x7f]
    %v40 = vld [vmem:[%s3] sm:$0x1]
    %v42 = vlaneseq
    %v43 = vshrl.u32 %v42, 7
    %v44 = vsub.s32 0, %v43
    %v45 = vrot.slane %v40, %v44
    %vm47 = vcmask 121856
    %v49 = vsel %vm47, %v33, 0
    %v52 = vsel %vm47, %v34, 0
    %v55 = vsel %vm47, %v35, 0
    %v58 = vsel %vm47, %v36, 0
    %v61 = vsel %vm47, %v37, 0
    %vm63 = vcmask 1046528
    %v65 = vsel %vm63, %v39, 0
    %67 = vmatprep.subr.mxu0 0.0
    %68 = vmatpush1.msra.mxu0 %v38
    %69 = vmatprep.subr.mxu0 0.0
    %70 = vmatpush1.msra.mxu0 %v65
    %71 = vmatprep.subr.mxu0 0.0
    %72 = vmatpush1.msra.mxu0 0.0
    %73 = vmatprep.subr.mxu0 0.0
    %74 = vmatpush1.msra.mxu0 0.0
    %75 = vmatprep.subr.mxu0 0.0
    %76 = vmatpush1.msra.mxu0 0.0
    %77 = vmatprep.subr.mxu0 0.0
    %78 = vmatpush1.msra.mxu0 0.0
    %79 = vmatprep.subr.mxu0 0.0
    %80 = vmatpush1.msra.mxu0 0.0
    %81 = vmatprep.subr.mxu0 0.0
    %82 = vmatpush1.msra.mxu0 0.0
    %83 = vmatprep.subr.mxu0 0.0
    %84 = vmatpush1.msra.mxu0 0.0
    %85 = vmatprep.subr.mxu0 0.0
    %86 = vmatpush1.msra.mxu0 0.0
    %87 = vmatprep.subr.mxu0 0.0
    %88 = vmatpush1.msra.mxu0 0.0
    %89 = vmatprep.subr.mxu0 0.0
    %90 = vmatpush1.msra.mxu0 0.0
    %91 = vmatprep.subr.mxu0 0.0
    %92 = vmatpush1.msra.mxu0 0.0
    %93 = vmatprep.subr.mxu0 0.0
    %94 = vmatpush1.msra.mxu0 0.0
    %95 = vmatprep.subr.mxu0 0.0
    %96 = vmatpush1.msra.mxu0 0.0
    %97 = vmatprep.subr.mxu0 0.0
    %98 = vmatpush1.msra.mxu0 0.0
    %99 = vmatprep.subr.mxu0 0.0
    %100 = vmatpush1.msra.mxu0 0.0
    %101 = vmatprep.subr.mxu0 0.0
    %102 = vmatpush1.msra.mxu0 0.0
    %103 = vmatprep.subr.mxu0 0.0
    %104 = vmatpush1.msra.mxu0 0.0
    %105 = vmatprep.subr.mxu0 0.0
    %106 = vmatpush1.msra.mxu0 0.0
    %107 = vmatprep.subr.mxu0 0.0
    %108 = vmatpush1.msra.mxu0 0.0
    %109 = vmatprep.subr.mxu0 0.0
    %110 = vmatpush1.msra.mxu0 0.0
    %111 = vmatprep.subr.mxu0 0.0
    %112 = vmatpush1.msra.mxu0 0.0
    %113 = vmatprep.subr.mxu0 0.0
    %114 = vmatpush1.msra.mxu0 0.0
    %115 = vmatprep.subr.mxu0 0.0
    %116 = vmatpush1.msra.mxu0 0.0
    %117 = vmatprep.subr.mxu0 0.0
    %118 = vmatpush1.msra.mxu0 0.0
    %119 = vmatprep.subr.mxu0 0.0
    %120 = vmatpush1.msra.mxu0 0.0
    %121 = vmatprep.subr.mxu0 0.0
    %122 = vmatpush1.msra.mxu0 0.0
    %123 = vmatprep.subr.mxu0 0.0
    %124 = vmatpush1.msra.mxu0 0.0
    %125 = vmatprep.subr.mxu0 0.0
    %126 = vmatpush1.msra.mxu0 0.0
    %127 = vmatprep.subr.mxu0 0.0
    %128 = vmatpush1.msra.mxu0 0.0
    %129 = vmatprep.subr.mxu0 0.0
    %130 = vmatpush1.msra.mxu0 0.0
    %131 = vmatprep.mubr.f32.mxu0 0.0
    %132 = vmatmul.mubr.f32.gmra.mrb[0].mxu0 %v49
    %v133 = vpop.f32.mrb[0].mxu0
    %v134 = vadd.f32 %v45, %v133
    %v135 = vpop.f32.mrb[0].mxu0
    %136 = vmatprep.mubr.f32.mxu0 0.0
    %137 = vmatmul.mubr.f32.gmra.mrb[0].mxu0 %v52
    %v138 = vpop.f32.mrb[0].mxu0
    %v139 = vadd.f32 %v45, %v138
    %v140 = vpop.f32.mrb[0].mxu0
    %141 = vmatprep.mubr.f32.mxu0 0.0
    %142 = vmatmul.mubr.f32.gmra.mrb[0].mxu0 %v55
    %v143 = vpop.f32.mrb[0].mxu0
    %v144 = vadd.f32 %v45, %v143
    %v145 = vpop.f32.mrb[0].mxu0
    %146 = vmatprep.mubr.f32.mxu0 0.0
    %147 = vmatmul.mubr.f32.gmra.mrb[0].mxu0 %v58
    %v148 = vpop.f32.mrb[0].mxu0
    %v149 = vadd.f32 %v45, %v148
    %v150 = vpop.f32.mrb[0].mxu0
    %151 = vmatprep.mubr.f32.mxu0 0.0
    %152 = vmatmul.mubr.f32.gmra.mrb[0].mxu0 %v61
    %v153 = vpop.f32.mrb[0].mxu0
    %v154 = vadd.f32 %v45, %v153
    %v155 = vpop.f32.mrb[0].mxu0
    %156 = vdwg.mxu0
    %v157 = vld [vmem:[%s2] sm:$0xff]
    %v158 = vld [vmem:[%s2 + $0x8] sm:$0xff]
    %v159 = vld [vmem:[%s2 + $0x10] sm:$0xff]
    %v160 = vld [vmem:[%s2 + $0x18] sm:$0xff]
    %vm161 = vcmask 261120
    %v163 = vsel %vm161, 0.0, 0
    %165 = vmatprep.subr.mxu0 0.0
    %166 = vmatpush1.msra.mxu0 %v157
    %167 = vmatprep.subr.mxu0 0.0
    %168 = vmatpush1.msra.mxu0 %v158
    %169 = vmatprep.subr.mxu0 0.0
    %170 = vmatpush1.msra.mxu0 %v159
    %171 = vmatprep.subr.mxu0 0.0
    %172 = vmatpush1.msra.mxu0 %v160
    %173 = vmatprep.subr.mxu0 0.0
    %174 = vmatpush1.msra.mxu0 0.0
    %175 = vmatprep.subr.mxu0 0.0
    %176 = vmatpush1.msra.mxu0 0.0
    %177 = vmatprep.subr.mxu0 0.0
    %178 = vmatpush1.msra.mxu0 0.0
    %179 = vmatprep.subr.mxu0 0.0
    %180 = vmatpush1.msra.mxu0 0.0
    %181 = vmatprep.subr.mxu0 0.0
    %182 = vmatpush1.msra.mxu0 0.0
    %183 = vmatprep.subr.mxu0 0.0
    %184 = vmatpush1.msra.mxu0 0.0
    %185 = vmatprep.subr.mxu0 0.0
    %186 = vmatpush1.msra.mxu0 0.0
    %187 = vmatprep.subr.mxu0 0.0
    %188 = vmatpush1.msra.mxu0 0.0
    %189 = vmatprep.subr.mxu0 0.0
    %190 = vmatpush1.msra.mxu0 0.0
    %191 = vmatprep.subr.mxu0 0.0
    %192 = vmatpush1.msra.mxu0 0.0
    %193 = vmatprep.subr.mxu0 0.0
    %194 = vmatpush1.msra.mxu0 0.0
    %195 = vmatprep.subr.mxu0 0.0
    %196 = vmatpush1.msra.mxu0 0.0
    %197 = vmatprep.subr.mxu0 0.0
    %198 = vmatpush1.msra.mxu0 0.0
    %199 = vmatprep.subr.mxu0 0.0
    %200 = vmatpush1.msra.mxu0 0.0
    %201 = vmatprep.subr.mxu0 0.0
    %202 = vmatpush1.msra.mxu0 0.0
    %203 = vmatprep.subr.mxu0 0.0
    %204 = vmatpush1.msra.mxu0 0.0
    %205 = vmatprep.subr.mxu0 0.0
    %206 = vmatpush1.msra.mxu0 0.0
    %207 = vmatprep.subr.mxu0 0.0
    %208 = vmatpush1.msra.mxu0 0.0
    %209 = vmatprep.subr.mxu0 0.0
    %210 = vmatpush1.msra.mxu0 0.0
    %211 = vmatprep.subr.mxu0 0.0
    %212 = vmatpush1.msra.mxu0 0.0
    %213 = vmatprep.subr.mxu0 0.0
    %214 = vmatpush1.msra.mxu0 0.0
    %215 = vmatprep.subr.mxu0 0.0
    %216 = vmatpush1.msra.mxu0 0.0
    %217 = vmatprep.subr.mxu0 0.0
    %218 = vmatpush1.msra.mxu0 0.0
    %219 = vmatprep.subr.mxu0 0.0
    %220 = vmatpush1.msra.mxu0 0.0
    %221 = vmatprep.subr.mxu0 0.0
    %222 = vmatpush1.msra.mxu0 0.0
    %223 = vmatprep.subr.mxu0 0.0
    %224 = vmatpush1.msra.mxu0 0.0
    %225 = vmatprep.subr.mxu0 0.0
    %226 = vmatpush1.msra.mxu0 0.0
    %227 = vmatprep.subr.mxu0 0.0
    %228 = vmatpush1.msra.mxu0 0.0
    %229 = vmatprep.mubr.f32.mxu0 0.0
    %230 = vmatmul.mubr.f32.gmra.mrb[0].mxu0 %v163
    %v231 = vpop.f32.mrb[0].mxu0
    %v232 = vadd.f32 0.0, %v231
    %v233 = vpop.f32.mrb[0].mxu0
    %234 = vdwg.mxu0
    %v235 = vadd.f32 %v134, %v232
    %v236 = vxor.u32 %v235, 2147483648
    %v237 = vmul.f32 %v236, 1.442695
    %v238 = vpow.pop %v237
    %v239 = vadd.f32 %v238, 1.0
    %v240 = vrcp.pop %v239
    %v241 = vmul.f32 1.0, %v240
    %v242 = vtanh.pop %v235
    %v243 = vmul.f32 %v241, 0.0
    %245 = vrot.lane.b32.xlu0 %v242, 64
    %v246 = vpop.permute.xlu0 %245
    %v248 = vmul.f32 %v241, %v246
    %250 = vrot.lane.b32.xlu0 %v248, 32
    %v251 = vpop.permute.xlu0 %250
    %v253 = vadd.f32 %v243, %v251
    %v254 = vtanh.pop %v253
    %256 = vrot.lane.b32.xlu0 %v254, 64
    %v257 = vpop.permute.xlu0 %256
    %v259 = vmul.f32 %v241, %v257
    %261 = vrot.lane.b32.xlu0 %v259, 32
    %v262 = vpop.permute.xlu0 %261
    %v263 = vsel %vm161, %v262, 0
    %265 = vmatprep.subr.mxu0 0.0
    %266 = vmatpush1.msra.mxu0 %v157
    %267 = vmatprep.subr.mxu0 0.0
    %268 = vmatpush1.msra.mxu0 %v158
    %269 = vmatprep.subr.mxu0 0.0
    %270 = vmatpush1.msra.mxu0 %v159
    %271 = vmatprep.subr.mxu0 0.0
    %272 = vmatpush1.msra.mxu0 %v160
    %273 = vmatprep.subr.mxu0 0.0
    %274 = vmatpush1.msra.mxu0 0.0
    %275 = vmatprep.subr.mxu0 0.0
    %276 = vmatpush1.msra.mxu0 0.0
    %277 = vmatprep.subr.mxu0 0.0
    %278 = vmatpush1.msra.mxu0 0.0
    %279 = vmatprep.subr.mxu0 0.0
    %280 = vmatpush1.msra.mxu0 0.0
    %281 = vmatprep.subr.mxu0 0.0
    %282 = vmatpush1.msra.mxu0 0.0
    %283 = vmatprep.subr.mxu0 0.0
    %284 = vmatpush1.msra.mxu0 0.0
    %285 = vmatprep.subr.mxu0 0.0
    %286 = vmatpush1.msra.mxu0 0.0
    %287 = vmatprep.subr.mxu0 0.0
    %288 = vmatpush1.msra.mxu0 0.0
    %289 = vmatprep.subr.mxu0 0.0
    %290 = vmatpush1.msra.mxu0 0.0
    %291 = vmatprep.subr.mxu0 0.0
    %292 = vmatpush1.msra.mxu0 0.0
    %293 = vmatprep.subr.mxu0 0.0
    %294 = vmatpush1.msra.mxu0 0.0
    %295 = vmatprep.subr.mxu0 0.0
    %296 = vmatpush1.msra.mxu0 0.0
    %297 = vmatprep.subr.mxu0 0.0
    %298 = vmatpush1.msra.mxu0 0.0
    %299 = vmatprep.subr.mxu0 0.0
    %300 = vmatpush1.msra.mxu0 0.0
    %301 = vmatprep.subr.mxu0 0.0
    %302 = vmatpush1.msra.mxu0 0.0
    %303 = vmatprep.subr.mxu0 0.0
    %304 = vmatpush1.msra.mxu0 0.0
    %305 = vmatprep.subr.mxu0 0.0
    %306 = vmatpush1.msra.mxu0 0.0
    %307 = vmatprep.subr.mxu0 0.0
    %308 = vmatpush1.msra.mxu0 0.0
    %309 = vmatprep.subr.mxu0 0.0
    %310 = vmatpush1.msra.mxu0 0.0
    %311 = vmatprep.subr.mxu0 0.0
    %312 = vmatpush1.msra.mxu0 0.0
    %313 = vmatprep.subr.mxu0 0.0
    %314 = vmatpush1.msra.mxu0 0.0
    %315 = vmatprep.subr.mxu0 0.0
    %316 = vmatpush1.msra.mxu0 0.0
    %317 = vmatprep.subr.mxu0 0.0
    %318 = vmatpush1.msra.mxu0 0.0
    %319 = vmatprep.subr.mxu0 0.0
    %320 = vmatpush1.msra.mxu0 0.0
    %321 = vmatprep.subr.mxu0 0.0
    %322 = vmatpush1.msra.mxu0 0.0
    %323 = vmatprep.subr.mxu0 0.0
    %324 = vmatpush1.msra.mxu0 0.0
    %325 = vmatprep.subr.mxu0 0.0
    %326 = vmatpush1.msra.mxu0 0.0
    %327 = vmatprep.subr.mxu0 0.0
    %328 = vmatpush1.msra.mxu0 0.0
    %329 = vmatprep.mubr.f32.mxu0 0.0
    %330 = vmatmul.mubr.f32.gmra.mrb[0].mxu0 %v263
    %v331 = vpop.f32.mrb[0].mxu0
    %v332 = vadd.f32 0.0, %v331
    %v333 = vpop.f32.mrb[0].mxu0
    %334 = vdwg.mxu0
    %v335 = vadd.f32 %v139, %v332
    %v336 = vxor.u32 %v335, 2147483648
    %v337 = vmul.f32 %v336, 1.442695
    %v338 = vpow.pop %v337
    %v339 = vadd.f32 %v338, 1.0
    %v340 = vrcp.pop %v339
    %v341 = vmul.f32 1.0, %v340
    %v342 = vtanh.pop %v335
    %v343 = vmul.f32 %v341, %v253
    %345 = vrot.lane.b32.xlu0 %v342, 64
    %v346 = vpop.permute.xlu0 %345
    %v348 = vmul.f32 %v341, %v346
    %350 = vrot.lane.b32.xlu0 %v348, 32
    %v351 = vpop.permute.xlu0 %350
    %v353 = vadd.f32 %v343, %v351
    %v354 = vtanh.pop %v353
    %356 = vrot.lane.b32.xlu0 %v354, 64
    %v357 = vpop.permute.xlu0 %356
    %v359 = vmul.f32 %v341, %v357
    %361 = vrot.lane.b32.xlu0 %v359, 32
    %v362 = vpop.permute.xlu0 %361
    %v363 = vsel %vm161, %v362, 0
    %365 = vmatprep.subr.mxu0 0.0
    %366 = vmatpush1.msra.mxu0 %v157
    %367 = vmatprep.subr.mxu0 0.0
    %368 = vmatpush1.msra.mxu0 %v158
    %369 = vmatprep.subr.mxu0 0.0
    %370 = vmatpush1.msra.mxu0 %v159
    %371 = vmatprep.subr.mxu0 0.0
    %372 = vmatpush1.msra.mxu0 %v160
    %373 = vmatprep.subr.mxu0 0.0
    %374 = vmatpush1.msra.mxu0 0.0
    %375 = vmatprep.subr.mxu0 0.0
    %376 = vmatpush1.msra.mxu0 0.0
    %377 = vmatprep.subr.mxu0 0.0
    %378 = vmatpush1.msra.mxu0 0.0
    %379 = vmatprep.subr.mxu0 0.0
    %380 = vmatpush1.msra.mxu0 0.0
    %381 = vmatprep.subr.mxu0 0.0
    %382 = vmatpush1.msra.mxu0 0.0
    %383 = vmatprep.subr.mxu0 0.0
    %384 = vmatpush1.msra.mxu0 0.0
    %385 = vmatprep.subr.mxu0 0.0
    %386 = vmatpush1.msra.mxu0 0.0
    %387 = vmatprep.subr.mxu0 0.0
    %388 = vmatpush1.msra.mxu0 0.0
    %389 = vmatprep.subr.mxu0 0.0
    %390 = vmatpush1.msra.mxu0 0.0
    %391 = vmatprep.subr.mxu0 0.0
    %392 = vmatpush1.msra.mxu0 0.0
    %393 = vmatprep.subr.mxu0 0.0
    %394 = vmatpush1.msra.mxu0 0.0
    %395 = vmatprep.subr.mxu0 0.0
    %396 = vmatpush1.msra.mxu0 0.0
    %397 = vmatprep.subr.mxu0 0.0
    %398 = vmatpush1.msra.mxu0 0.0
    %399 = vmatprep.subr.mxu0 0.0
    %400 = vmatpush1.msra.mxu0 0.0
    %401 = vmatprep.subr.mxu0 0.0
    %402 = vmatpush1.msra.mxu0 0.0
    %403 = vmatprep.subr.mxu0 0.0
    %404 = vmatpush1.msra.mxu0 0.0
    %405 = vmatprep.subr.mxu0 0.0
    %406 = vmatpush1.msra.mxu0 0.0
    %407 = vmatprep.subr.mxu0 0.0
    %408 = vmatpush1.msra.mxu0 0.0
    %409 = vmatprep.subr.mxu0 0.0
    %410 = vmatpush1.msra.mxu0 0.0
    %411 = vmatprep.subr.mxu0 0.0
    %412 = vmatpush1.msra.mxu0 0.0
    %413 = vmatprep.subr.mxu0 0.0
    %414 = vmatpush1.msra.mxu0 0.0
    %415 = vmatprep.subr.mxu0 0.0
    %416 = vmatpush1.msra.mxu0 0.0
    %417 = vmatprep.subr.mxu0 0.0
    %418 = vmatpush1.msra.mxu0 0.0
    %419 = vmatprep.subr.mxu0 0.0
    %420 = vmatpush1.msra.mxu0 0.0
    %421 = vmatprep.subr.mxu0 0.0
    %422 = vmatpush1.msra.mxu0 0.0
    %423 = vmatprep.subr.mxu0 0.0
    %424 = vmatpush1.msra.mxu0 0.0
    %425 = vmatprep.subr.mxu0 0.0
    %426 = vmatpush1.msra.mxu0 0.0
    %427 = vmatprep.subr.mxu0 0.0
    %428 = vmatpush1.msra.mxu0 0.0
    %429 = vmatprep.mubr.f32.mxu0 0.0
    %430 = vmatmul.mubr.f32.gmra.mrb[0].mxu0 %v363
    %v431 = vpop.f32.mrb[0].mxu0
    %v432 = vadd.f32 0.0, %v431
    %v433 = vpop.f32.mrb[0].mxu0
    %434 = vdwg.mxu0
    %v435 = vadd.f32 %v144, %v432
    %v436 = vxor.u32 %v435, 2147483648
    %v437 = vmul.f32 %v436, 1.442695
    %v438 = vpow.pop %v437
    %v439 = vadd.f32 %v438, 1.0
    %v440 = vrcp.pop %v439
    %v441 = vmul.f32 1.0, %v440
    %v442 = vtanh.pop %v435
    %v443 = vmul.f32 %v441, %v353
    %445 = vrot.lane.b32.xlu0 %v442, 64
    %v446 = vpop.permute.xlu0 %445
    %v448 = vmul.f32 %v441, %v446
    %450 = vrot.lane.b32.xlu0 %v448, 32
    %v451 = vpop.permute.xlu0 %450
    %v453 = vadd.f32 %v443, %v451
    %v454 = vtanh.pop %v453
    %456 = vrot.lane.b32.xlu0 %v454, 64
    %v457 = vpop.permute.xlu0 %456
    %v459 = vmul.f32 %v441, %v457
    %461 = vrot.lane.b32.xlu0 %v459, 32
    %v462 = vpop.permute.xlu0 %461
    %v463 = vsel %vm161, %v462, 0
    %465 = vmatprep.subr.mxu0 0.0
    %466 = vmatpush1.msra.mxu0 %v157
    %467 = vmatprep.subr.mxu0 0.0
    %468 = vmatpush1.msra.mxu0 %v158
    %469 = vmatprep.subr.mxu0 0.0
    %470 = vmatpush1.msra.mxu0 %v159
    %471 = vmatprep.subr.mxu0 0.0
    %472 = vmatpush1.msra.mxu0 %v160
    %473 = vmatprep.subr.mxu0 0.0
    %474 = vmatpush1.msra.mxu0 0.0
    %475 = vmatprep.subr.mxu0 0.0
    %476 = vmatpush1.msra.mxu0 0.0
    %477 = vmatprep.subr.mxu0 0.0
    %478 = vmatpush1.msra.mxu0 0.0
    %479 = vmatprep.subr.mxu0 0.0
    %480 = vmatpush1.msra.mxu0 0.0
    %481 = vmatprep.subr.mxu0 0.0
    %482 = vmatpush1.msra.mxu0 0.0
    %483 = vmatprep.subr.mxu0 0.0
    %484 = vmatpush1.msra.mxu0 0.0
    %485 = vmatprep.subr.mxu0 0.0
    %486 = vmatpush1.msra.mxu0 0.0
    %487 = vmatprep.subr.mxu0 0.0
    %488 = vmatpush1.msra.mxu0 0.0
    %489 = vmatprep.subr.mxu0 0.0
    %490 = vmatpush1.msra.mxu0 0.0
    %491 = vmatprep.subr.mxu0 0.0
    %492 = vmatpush1.msra.mxu0 0.0
    %493 = vmatprep.subr.mxu0 0.0
    %494 = vmatpush1.msra.mxu0 0.0
    %495 = vmatprep.subr.mxu0 0.0
    %496 = vmatpush1.msra.mxu0 0.0
    %497 = vmatprep.subr.mxu0 0.0
    %498 = vmatpush1.msra.mxu0 0.0
    %499 = vmatprep.subr.mxu0 0.0
    %500 = vmatpush1.msra.mxu0 0.0
    %501 = vmatprep.subr.mxu0 0.0
    %502 = vmatpush1.msra.mxu0 0.0
    %503 = vmatprep.subr.mxu0 0.0
    %504 = vmatpush1.msra.mxu0 0.0
    %505 = vmatprep.subr.mxu0 0.0
    %506 = vmatpush1.msra.mxu0 0.0
    %507 = vmatprep.subr.mxu0 0.0
    %508 = vmatpush1.msra.mxu0 0.0
    %509 = vmatprep.subr.mxu0 0.0
    %510 = vmatpush1.msra.mxu0 0.0
    %511 = vmatprep.subr.mxu0 0.0
    %512 = vmatpush1.msra.mxu0 0.0
    %513 = vmatprep.subr.mxu0 0.0
    %514 = vmatpush1.msra.mxu0 0.0
    %515 = vmatprep.subr.mxu0 0.0
    %516 = vmatpush1.msra.mxu0 0.0
    %517 = vmatprep.subr.mxu0 0.0
    %518 = vmatpush1.msra.mxu0 0.0
    %519 = vmatprep.subr.mxu0 0.0
    %520 = vmatpush1.msra.mxu0 0.0
    %521 = vmatprep.subr.mxu0 0.0
    %522 = vmatpush1.msra.mxu0 0.0
    %523 = vmatprep.subr.mxu0 0.0
    %524 = vmatpush1.msra.mxu0 0.0
    %525 = vmatprep.subr.mxu0 0.0
    %526 = vmatpush1.msra.mxu0 0.0
    %527 = vmatprep.subr.mxu0 0.0
    %528 = vmatpush1.msra.mxu0 0.0
    %529 = vmatprep.mubr.f32.mxu0 0.0
    %530 = vmatmul.mubr.f32.gmra.mrb[0].mxu0 %v463
    %v531 = vpop.f32.mrb[0].mxu0
    %v532 = vadd.f32 0.0, %v531
    %v533 = vpop.f32.mrb[0].mxu0
    %534 = vdwg.mxu0
    %v535 = vadd.f32 %v149, %v532
    %v536 = vxor.u32 %v535, 2147483648
    %v537 = vmul.f32 %v536, 1.442695
    %v538 = vpow.pop %v537
    %v539 = vadd.f32 %v538, 1.0
    %v540 = vrcp.pop %v539
    %v541 = vmul.f32 1.0, %v540
    %v542 = vtanh.pop %v535
    %v543 = vmul.f32 %v541, %v453
    %545 = vrot.lane.b32.xlu0 %v542, 64
    %v546 = vpop.permute.xlu0 %545
    %v548 = vmul.f32 %v541, %v546
    %550 = vrot.lane.b32.xlu0 %v548, 32
    %v551 = vpop.permute.xlu0 %550
    %v553 = vadd.f32 %v543, %v551
    %v554 = vtanh.pop %v553
    %556 = vrot.lane.b32.xlu0 %v554, 64
    %v557 = vpop.permute.xlu0 %556
    %v559 = vmul.f32 %v541, %v557
    %561 = vrot.lane.b32.xlu0 %v559, 32
    %v562 = vpop.permute.xlu0 %561
    %v563 = vsel %vm161, %v562, 0
    %565 = vmatprep.subr.mxu0 0.0
    %566 = vmatpush1.msra.mxu0 %v157
    %567 = vmatprep.subr.mxu0 0.0
    %568 = vmatpush1.msra.mxu0 %v158
    %569 = vmatprep.subr.mxu0 0.0
    %570 = vmatpush1.msra.mxu0 %v159
    %571 = vmatprep.subr.mxu0 0.0
    %572 = vmatpush1.msra.mxu0 %v160
    %573 = vmatprep.subr.mxu0 0.0
    %574 = vmatpush1.msra.mxu0 0.0
    %575 = vmatprep.subr.mxu0 0.0
    %576 = vmatpush1.msra.mxu0 0.0
    %577 = vmatprep.subr.mxu0 0.0
    %578 = vmatpush1.msra.mxu0 0.0
    %579 = vmatprep.subr.mxu0 0.0
    %580 = vmatpush1.msra.mxu0 0.0
    %581 = vmatprep.subr.mxu0 0.0
    %582 = vmatpush1.msra.mxu0 0.0
    %583 = vmatprep.subr.mxu0 0.0
    %584 = vmatpush1.msra.mxu0 0.0
    %585 = vmatprep.subr.mxu0 0.0
    %586 = vmatpush1.msra.mxu0 0.0
    %587 = vmatprep.subr.mxu0 0.0
    %588 = vmatpush1.msra.mxu0 0.0
    %589 = vmatprep.subr.mxu0 0.0
    %590 = vmatpush1.msra.mxu0 0.0
    %591 = vmatprep.subr.mxu0 0.0
    %592 = vmatpush1.msra.mxu0 0.0
    %593 = vmatprep.subr.mxu0 0.0
    %594 = vmatpush1.msra.mxu0 0.0
    %595 = vmatprep.subr.mxu0 0.0
    %596 = vmatpush1.msra.mxu0 0.0
    %597 = vmatprep.subr.mxu0 0.0
    %598 = vmatpush1.msra.mxu0 0.0
    %599 = vmatprep.subr.mxu0 0.0
    %600 = vmatpush1.msra.mxu0 0.0
    %601 = vmatprep.subr.mxu0 0.0
    %602 = vmatpush1.msra.mxu0 0.0
    %603 = vmatprep.subr.mxu0 0.0
    %604 = vmatpush1.msra.mxu0 0.0
    %605 = vmatprep.subr.mxu0 0.0
    %606 = vmatpush1.msra.mxu0 0.0
    %607 = vmatprep.subr.mxu0 0.0
    %608 = vmatpush1.msra.mxu0 0.0
    %609 = vmatprep.subr.mxu0 0.0
    %610 = vmatpush1.msra.mxu0 0.0
    %611 = vmatprep.subr.mxu0 0.0
    %612 = vmatpush1.msra.mxu0 0.0
    %613 = vmatprep.subr.mxu0 0.0
    %614 = vmatpush1.msra.mxu0 0.0
    %615 = vmatprep.subr.mxu0 0.0
    %616 = vmatpush1.msra.mxu0 0.0
    %617 = vmatprep.subr.mxu0 0.0
    %618 = vmatpush1.msra.mxu0 0.0
    %619 = vmatprep.subr.mxu0 0.0
    %620 = vmatpush1.msra.mxu0 0.0
    %621 = vmatprep.subr.mxu0 0.0
    %622 = vmatpush1.msra.mxu0 0.0
    %623 = vmatprep.subr.mxu0 0.0
    %624 = vmatpush1.msra.mxu0 0.0
    %625 = vmatprep.subr.mxu0 0.0
    %626 = vmatpush1.msra.mxu0 0.0
    %627 = vmatprep.subr.mxu0 0.0
    %628 = vmatpush1.msra.mxu0 0.0
    %629 = vmatprep.mubr.f32.mxu0 0.0
    %630 = vmatmul.mubr.f32.gmra.mrb[0].mxu0 %v563
    %v631 = vpop.f32.mrb[0].mxu0
    %v632 = vadd.f32 0.0, %v631
    %v633 = vpop.f32.mrb[0].mxu0
    %634 = vdwg.mxu0
    %v635 = vadd.f32 %v154, %v632
    %v636 = vxor.u32 %v635, 2147483648
    %v637 = vmul.f32 %v636, 1.442695
    %v638 = vpow.pop %v637
    %v639 = vadd.f32 %v638, 1.0
    %v640 = vrcp.pop %v639
    %v641 = vmul.f32 1.0, %v640
    %v642 = vtanh.pop %v635
    %v643 = vmul.f32 %v641, %v553
    %645 = vrot.lane.b32.xlu0 %v642, 64
    %v646 = vpop.permute.xlu0 %645
    %v648 = vmul.f32 %v641, %v646
    %650 = vrot.lane.b32.xlu0 %v648, 32
    %v651 = vpop.permute.xlu0 %650
    %v653 = vadd.f32 %v643, %v651
    %v654 = vtanh.pop %v653
    %656 = vrot.lane.b32.xlu0 %v654, 64
    %v657 = vpop.permute.xlu0 %656
    %v659 = vmul.f32 %v641, %v657
    %661 = vrot.lane.b32.xlu0 %v359, 64
    %v662 = vpop.permute.xlu0 %661
    %664 = vrot.lane.b32.xlu0 %v459, 96
    %v665 = vpop.permute.xlu0 %664
    %668 = vrot.lane.b32.xlu0 %v659, 32
    %v669 = vpop.permute.xlu0 %668
    %v670 = vsel %vm161, %v262, %v662
    %vm671 = vcmask 523264
    %v672 = vsel %vm671, %v670, %v665
    %vm673 = vcmask 785408
    %v674 = vsel %vm673, %v672, %v559
    %v675 = vld [vmem:[%s4] sm:$0xff]
    %v676 = vld [vmem:[%s4 + $0x8] sm:$0xff]
    %v677 = vld [vmem:[%s4 + $0x10] sm:$0xff]
    %v678 = vld [vmem:[%s4 + $0x18] sm:$0xff]
    %v679 = vld [vmem:[%s4 + $0x20] sm:$0xff]
    %v680 = vld [vmem:[%s4 + $0x28] sm:$0xff]
    %v681 = vld [vmem:[%s4 + $0x30] sm:$0xff]
    %v682 = vld [vmem:[%s4 + $0x38] sm:$0xff]
    %v683 = vld [vmem:[%s4 + $0x40] sm:$0xff]
    %v684 = vld [vmem:[%s4 + $0x48] sm:$0xff]
    %v685 = vld [vmem:[%s4 + $0x50] sm:$0xff]
    %v686 = vld [vmem:[%s4 + $0x58] sm:$0xff]
    %v687 = vld [vmem:[%s4 + $0x60] sm:$0xff]
    %v688 = vld [vmem:[%s4 + $0x68] sm:$0xff]
    %v689 = vld [vmem:[%s4 + $0x70] sm:$0xff]
    %v690 = vld [vmem:[%s4 + $0x78] sm:$0xff]
    %v691 = vld [vmem:[%s4 + $0x80] sm:$0xff]
    %v692 = vld [vmem:[%s4 + $0x88] sm:$0xff]
    %v693 = vld [vmem:[%s4 + $0x90] sm:$0xff]
    %v694 = vld [vmem:[%s4 + $0x98] sm:$0xff]
    %v695 = vld [vmem:[%s6] sm:$0x1]
    %v697 = vlaneseq
    %v698 = vshrl.u32 %v697, 7
    %v699 = vsub.s32 0, %v698
    %v700 = vrot.slane %v695, %v699
    %v702 = vsel %vm161, %v669, 0
    %704 = vmatprep.subr.mxu0 0.0
    %705 = vmatpush1.msra.mxu0 %v675
    %706 = vmatprep.subr.mxu0 0.0
    %707 = vmatpush1.msra.mxu0 %v676
    %708 = vmatprep.subr.mxu0 0.0
    %709 = vmatpush1.msra.mxu0 %v677
    %710 = vmatprep.subr.mxu0 0.0
    %711 = vmatpush1.msra.mxu0 %v678
    %712 = vmatprep.subr.mxu0 0.0
    %713 = vmatpush1.msra.mxu0 %v679
    %714 = vmatprep.subr.mxu0 0.0
    %715 = vmatpush1.msra.mxu0 %v680
    %716 = vmatprep.subr.mxu0 0.0
    %717 = vmatpush1.msra.mxu0 %v681
    %718 = vmatprep.subr.mxu0 0.0
    %719 = vmatpush1.msra.mxu0 %v682
    %720 = vmatprep.subr.mxu0 0.0
    %721 = vmatpush1.msra.mxu0 %v683
    %722 = vmatprep.subr.mxu0 0.0
    %723 = vmatpush1.msra.mxu0 %v684
    %724 = vmatprep.subr.mxu0 0.0
    %725 = vmatpush1.msra.mxu0 %v685
    %726 = vmatprep.subr.mxu0 0.0
    %727 = vmatpush1.msra.mxu0 %v686
    %728 = vmatprep.subr.mxu0 0.0
    %729 = vmatpush1.msra.mxu0 %v687
    %730 = vmatprep.subr.mxu0 0.0
    %731 = vmatpush1.msra.mxu0 %v688
    %732 = vmatprep.subr.mxu0 0.0
    %733 = vmatpush1.msra.mxu0 %v689
    %734 = vmatprep.subr.mxu0 0.0
    %735 = vmatpush1.msra.mxu0 %v690
    %736 = vmatprep.subr.mxu0 0.0
    %737 = vmatpush1.msra.mxu0 %v691
    %738 = vmatprep.subr.mxu0 0.0
    %739 = vmatpush1.msra.mxu0 %v692
    %740 = vmatprep.subr.mxu0 0.0
    %741 = vmatpush1.msra.mxu0 %v693
    %742 = vmatprep.subr.mxu0 0.0
    %743 = vmatpush1.msra.mxu0 %v694
    %744 = vmatprep.subr.mxu0 0.0
    %745 = vmatpush1.msra.mxu0 0.0
    %746 = vmatprep.subr.mxu0 0.0
    %747 = vmatpush1.msra.mxu0 0.0
    %748 = vmatprep.subr.mxu0 0.0
    %749 = vmatpush1.msra.mxu0 0.0
    %750 = vmatprep.subr.mxu0 0.0
    %751 = vmatpush1.msra.mxu0 0.0
    %752 = vmatprep.subr.mxu0 0.0
    %753 = vmatpush1.msra.mxu0 0.0
    %754 = vmatprep.subr.mxu0 0.0
    %755 = vmatpush1.msra.mxu0 0.0
    %756 = vmatprep.subr.mxu0 0.0
    %757 = vmatpush1.msra.mxu0 0.0
    %758 = vmatprep.subr.mxu0 0.0
    %759 = vmatpush1.msra.mxu0 0.0
    %760 = vmatprep.subr.mxu0 0.0
    %761 = vmatpush1.msra.mxu0 0.0
    %762 = vmatprep.subr.mxu0 0.0
    %763 = vmatpush1.msra.mxu0 0.0
    %764 = vmatprep.subr.mxu0 0.0
    %765 = vmatpush1.msra.mxu0 0.0
    %766 = vmatprep.subr.mxu0 0.0
    %767 = vmatpush1.msra.mxu0 0.0
    %768 = vmatprep.mubr.f32.mxu0 %v702
    %769 = vmatmul.mubr.f32.gmra.mrb[0].mxu0 %v674
    %v770 = vpop.f32.mrb[0].mxu0
    %v771 = vadd.f32 %v700, %v770
    %v772 = vpop.f32.mrb[0].mxu0
    %773 = vdwg.mxu0
    %v774 = vld [vmem:[%s5] sm:$0xff]
    %v775 = vld [vmem:[%s5 + $0x8] sm:$0xf]
    %vm776 = vcmask 97280
    %v777 = vsel %vm776, 0.0, 0
    %vm779 = vcmask 1043456
    %v781 = vsel %vm779, %v775, 0
    %783 = vmatprep.subr.mxu0 0.0
    %784 = vmatpush1.msra.mxu0 %v774
    %785 = vmatprep.subr.mxu0 0.0
    %786 = vmatpush1.msra.mxu0 %v781
    %787 = vmatprep.subr.mxu0 0.0
    %788 = vmatpush1.msra.mxu0 0.0
    %789 = vmatprep.subr.mxu0 0.0
    %790 = vmatpush1.msra.mxu0 0.0
    %791 = vmatprep.subr.mxu0 0.0
    %792 = vmatpush1.msra.mxu0 0.0
    %793 = vmatprep.subr.mxu0 0.0
    %794 = vmatpush1.msra.mxu0 0.0
    %795 = vmatprep.subr.mxu0 0.0
    %796 = vmatpush1.msra.mxu0 0.0
    %797 = vmatprep.subr.mxu0 0.0
    %798 = vmatpush1.msra.mxu0 0.0
    %799 = vmatprep.subr.mxu0 0.0
    %800 = vmatpush1.msra.mxu0 0.0
    %801 = vmatprep.subr.mxu0 0.0
    %802 = vmatpush1.msra.mxu0 0.0
    %803 = vmatprep.subr.mxu0 0.0
    %804 = vmatpush1.msra.mxu0 0.0
    %805 = vmatprep.subr.mxu0 0.0
    %806 = vmatpush1.msra.mxu0 0.0
    %807 = vmatprep.subr.mxu0 0.0
    %808 = vmatpush1.msra.mxu0 0.0
    %809 = vmatprep.subr.mxu0 0.0
    %810 = vmatpush1.msra.mxu0 0.0
    %811 = vmatprep.subr.mxu0 0.0
    %812 = vmatpush1.msra.mxu0 0.0
    %813 = vmatprep.subr.mxu0 0.0
    %814 = vmatpush1.msra.mxu0 0.0
    %815 = vmatprep.subr.mxu0 0.0
    %816 = vmatpush1.msra.mxu0 0.0
    %817 = vmatprep.subr.mxu0 0.0
    %818 = vmatpush1.msra.mxu0 0.0
    %819 = vmatprep.subr.mxu0 0.0
    %820 = vmatpush1.msra.mxu0 0.0
    %821 = vmatprep.subr.mxu0 0.0
    %822 = vmatpush1.msra.mxu0 0.0
    %823 = vmatprep.subr.mxu0 0.0
    %824 = vmatpush1.msra.mxu0 0.0
    %825 = vmatprep.subr.mxu0 0.0
    %826 = vmatpush1.msra.mxu0 0.0
    %827 = vmatprep.subr.mxu0 0.0
    %828 = vmatpush1.msra.mxu0 0.0
    %829 = vmatprep.subr.mxu0 0.0
    %830 = vmatpush1.msra.mxu0 0.0
    %831 = vmatprep.subr.mxu0 0.0
    %832 = vmatpush1.msra.mxu0 0.0
    %833 = vmatprep.subr.mxu0 0.0
    %834 = vmatpush1.msra.mxu0 0.0
    %835 = vmatprep.subr.mxu0 0.0
    %836 = vmatpush1.msra.mxu0 0.0
    %837 = vmatprep.subr.mxu0 0.0
    %838 = vmatpush1.msra.mxu0 0.0
    %839 = vmatprep.subr.mxu0 0.0
    %840 = vmatpush1.msra.mxu0 0.0
    %841 = vmatprep.subr.mxu0 0.0
    %842 = vmatpush1.msra.mxu0 0.0
    %843 = vmatprep.subr.mxu0 0.0
    %844 = vmatpush1.msra.mxu0 0.0
    %845 = vmatprep.subr.mxu0 0.0
    %846 = vmatpush1.msra.mxu0 0.0
    %847 = vmatprep.mubr.f32.mxu0 0.0
    %848 = vmatmul.mubr.f32.gmra.mrb[0].mxu0 %v777
    %v849 = vpop.f32.mrb[0].mxu0
    %v850 = vadd.f32 0.0, %v849
    %v851 = vpop.f32.mrb[0].mxu0
    %852 = vdwg.mxu0
    %v853 = vadd.f32 %v771, %v850
    %v854 = vxor.u32 %v853, 2147483648
    %v855 = vmul.f32 %v854, 1.442695
    %v856 = vpow.pop %v855
    %v857 = vadd.f32 %v856, 1.0
    %v858 = vrcp.pop %v857
    %v859 = vmul.f32 1.0, %v858
    %v860 = vtanh.pop %v853
    %v861 = vmul.f32 %v859, 0.0
    %863 = vrot.lane.b32.xlu0 %v860, 104
    %v864 = vpop.permute.xlu0 %863
    %v866 = vmul.f32 %v859, %v864
    %868 = vrot.lane.b32.xlu0 %v866, 12
    %v869 = vpop.permute.xlu0 %868
    %v871 = vadd.f32 %v861, %v869
    %v872 = vtanh.pop %v871
    %874 = vrot.lane.b32.xlu0 %v872, 24
    %v875 = vpop.permute.xlu0 %874
    %v877 = vmul.f32 %v859, %v875
    %879 = vrot.lane.b32.xlu0 %v877, 92
    %v880 = vpop.permute.xlu0 %879
    %v881 = vsel %vm776, %v880, 0
    %883 = vmatprep.subr.mxu0 0.0
    %884 = vmatpush1.msra.mxu0 %v774
    %885 = vmatprep.subr.mxu0 0.0
    %886 = vmatpush1.msra.mxu0 %v781
    %887 = vmatprep.subr.mxu0 0.0
    %888 = vmatpush1.msra.mxu0 0.0
    %889 = vmatprep.subr.mxu0 0.0
    %890 = vmatpush1.msra.mxu0 0.0
    %891 = vmatprep.subr.mxu0 0.0
    %892 = vmatpush1.msra.mxu0 0.0
    %893 = vmatprep.subr.mxu0 0.0
    %894 = vmatpush1.msra.mxu0 0.0
    %895 = vmatprep.subr.mxu0 0.0
    %896 = vmatpush1.msra.mxu0 0.0
    %897 = vmatprep.subr.mxu0 0.0
    %898 = vmatpush1.msra.mxu0 0.0
    %899 = vmatprep.subr.mxu0 0.0
    %900 = vmatpush1.msra.mxu0 0.0
    %901 = vmatprep.subr.mxu0 0.0
    %902 = vmatpush1.msra.mxu0 0.0
    %903 = vmatprep.subr.mxu0 0.0
    %904 = vmatpush1.msra.mxu0 0.0
    %905 = vmatprep.subr.mxu0 0.0
    %906 = vmatpush1.msra.mxu0 0.0
    %907 = vmatprep.subr.mxu0 0.0
    %908 = vmatpush1.msra.mxu0 0.0
    %909 = vmatprep.subr.mxu0 0.0
    %910 = vmatpush1.msra.mxu0 0.0
    %911 = vmatprep.subr.mxu0 0.0
    %912 = vmatpush1.msra.mxu0 0.0
    %913 = vmatprep.subr.mxu0 0.0
    %914 = vmatpush1.msra.mxu0 0.0
    %915 = vmatprep.subr.mxu0 0.0
    %916 = vmatpush1.msra.mxu0 0.0
    %917 = vmatprep.subr.mxu0 0.0
    %918 = vmatpush1.msra.mxu0 0.0
    %919 = vmatprep.subr.mxu0 0.0
    %920 = vmatpush1.msra.mxu0 0.0
    %921 = vmatprep.subr.mxu0 0.0
    %922 = vmatpush1.msra.mxu0 0.0
    %923 = vmatprep.subr.mxu0 0.0
    %924 = vmatpush1.msra.mxu0 0.0
    %925 = vmatprep.subr.mxu0 0.0
    %926 = vmatpush1.msra.mxu0 0.0
    %927 = vmatprep.subr.mxu0 0.0
    %928 = vmatpush1.msra.mxu0 0.0
    %929 = vmatprep.subr.mxu0 0.0
    %930 = vmatpush1.msra.mxu0 0.0
    %931 = vmatprep.subr.mxu0 0.0
    %932 = vmatpush1.msra.mxu0 0.0
    %933 = vmatprep.subr.mxu0 0.0
    %934 = vmatpush1.msra.mxu0 0.0
    %935 = vmatprep.subr.mxu0 0.0
    %936 = vmatpush1.msra.mxu0 0.0
    %937 = vmatprep.subr.mxu0 0.0
    %938 = vmatpush1.msra.mxu0 0.0
    %939 = vmatprep.subr.mxu0 0.0
    %940 = vmatpush1.msra.mxu0 0.0
    %941 = vmatprep.subr.mxu0 0.0
    %942 = vmatpush1.msra.mxu0 0.0
    %943 = vmatprep.subr.mxu0 0.0
    %944 = vmatpush1.msra.mxu0 0.0
    %945 = vmatprep.subr.mxu0 0.0
    %946 = vmatpush1.msra.mxu0 0.0
    %947 = vmatprep.mubr.f32.mxu0 0.0
    %948 = vmatmul.mubr.f32.gmra.mrb[0].mxu0 %v881
    %v949 = vpop.f32.mrb[0].mxu0
    %v950 = vadd.f32 0.0, %v949
    %v951 = vpop.f32.mrb[0].mxu0
    %952 = vdwg.mxu0
    %v953 = vadd.f32 %v771, %v950
    %v954 = vxor.u32 %v953, 2147483648
    %v955 = vmul.f32 %v954, 1.442695
    %v956 = vpow.pop %v955
    %v957 = vadd.f32 %v956, 1.0
    %v958 = vrcp.pop %v957
    %v959 = vmul.f32 1.0, %v958
    %v960 = vtanh.pop %v953
    %v961 = vmul.f32 %v959, %v871
    %963 = vrot.lane.b32.xlu0 %v960, 104
    %v964 = vpop.permute.xlu0 %963
    %v966 = vmul.f32 %v959, %v964
    %968 = vrot.lane.b32.xlu0 %v966, 12
    %v969 = vpop.permute.xlu0 %968
    %v971 = vadd.f32 %v961, %v969
    %v972 = vtanh.pop %v971
    %974 = vrot.lane.b32.xlu0 %v972, 24
    %v975 = vpop.permute.xlu0 %974
    %v977 = vmul.f32 %v959, %v975
    %979 = vrot.lane.b32.xlu0 %v977, 92
    %v980 = vpop.permute.xlu0 %979
    %v981 = vsel %vm776, %v980, 0
    %983 = vmatprep.subr.mxu0 0.0
    %984 = vmatpush1.msra.mxu0 %v774
    %985 = vmatprep.subr.mxu0 0.0
    %986 = vmatpush1.msra.mxu0 %v781
    %987 = vmatprep.subr.mxu0 0.0
    %988 = vmatpush1.msra.mxu0 0.0
    %989 = vmatprep.subr.mxu0 0.0
    %990 = vmatpush1.msra.mxu0 0.0
    %991 = vmatprep.subr.mxu0 0.0
    %992 = vmatpush1.msra.mxu0 0.0
    %993 = vmatprep.subr.mxu0 0.0
    %994 = vmatpush1.msra.mxu0 0.0
    %995 = vmatprep.subr.mxu0 0.0
    %996 = vmatpush1.msra.mxu0 0.0
    %997 = vmatprep.subr.mxu0 0.0
    %998 = vmatpush1.msra.mxu0 0.0
    %999 = vmatprep.subr.mxu0 0.0
    %1000 = vmatpush1.msra.mxu0 0.0
    %1001 = vmatprep.subr.mxu0 0.0
    %1002 = vmatpush1.msra.mxu0 0.0
    %1003 = vmatprep.subr.mxu0 0.0
    %1004 = vmatpush1.msra.mxu0 0.0
    %1005 = vmatprep.subr.mxu0 0.0
    %1006 = vmatpush1.msra.mxu0 0.0
    %1007 = vmatprep.subr.mxu0 0.0
    %1008 = vmatpush1.msra.mxu0 0.0
    %1009 = vmatprep.subr.mxu0 0.0
    %1010 = vmatpush1.msra.mxu0 0.0
    %1011 = vmatprep.subr.mxu0 0.0
    %1012 = vmatpush1.msra.mxu0 0.0
    %1013 = vmatprep.subr.mxu0 0.0
    %1014 = vmatpush1.msra.mxu0 0.0
    %1015 = vmatprep.subr.mxu0 0.0
    %1016 = vmatpush1.msra.mxu0 0.0
    %1017 = vmatprep.subr.mxu0 0.0
    %1018 = vmatpush1.msra.mxu0 0.0
    %1019 = vmatprep.subr.mxu0 0.0
    %1020 = vmatpush1.msra.mxu0 0.0
    %1021 = vmatprep.subr.mxu0 0.0
    %1022 = vmatpush1.msra.mxu0 0.0
    %1023 = vmatprep.subr.mxu0 0.0
    %1024 = vmatpush1.msra.mxu0 0.0
    %1025 = vmatprep.subr.mxu0 0.0
    %1026 = vmatpush1.msra.mxu0 0.0
    %1027 = vmatprep.subr.mxu0 0.0
    %1028 = vmatpush1.msra.mxu0 0.0
    %1029 = vmatprep.subr.mxu0 0.0
    %1030 = vmatpush1.msra.mxu0 0.0
    %1031 = vmatprep.subr.mxu0 0.0
    %1032 = vmatpush1.msra.mxu0 0.0
    %1033 = vmatprep.subr.mxu0 0.0
    %1034 = vmatpush1.msra.mxu0 0.0
    %1035 = vmatprep.subr.mxu0 0.0
    %1036 = vmatpush1.msra.mxu0 0.0
    %1037 = vmatprep.subr.mxu0 0.0
    %1038 = vmatpush1.msra.mxu0 0.0
    %1039 = vmatprep.subr.mxu0 0.0
    %1040 = vmatpush1.msra.mxu0 0.0
    %1041 = vmatprep.subr.mxu0 0.0
    %1042 = vmatpush1.msra.mxu0 0.0
    %1043 = vmatprep.subr.mxu0 0.0
    %1044 = vmatpush1.msra.mxu0 0.0
    %1045 = vmatprep.subr.mxu0 0.0
    %1046 = vmatpush1.msra.mxu0 0.0
    %1047 = vmatprep.mubr.f32.mxu0 0.0
    %1048 = vmatmul.mubr.f32.gmra.mrb[0].mxu0 %v981
    %v1049 = vpop.f32.mrb[0].mxu0
    %v1050 = vadd.f32 0.0, %v1049
    %v1051 = vpop.f32.mrb[0].mxu0
    %1052 = vdwg.mxu0
    %v1053 = vadd.f32 %v771, %v1050
    %v1054 = vxor.u32 %v1053, 2147483648
    %v1055 = vmul.f32 %v1054, 1.442695
    %v1056 = vpow.pop %v1055
    %v1057 = vadd.f32 %v1056, 1.0
    %v1058 = vrcp.pop %v1057
    %v1059 = vmul.f32 1.0, %v1058
    %v1060 = vtanh.pop %v1053
    %v1061 = vmul.f32 %v1059, %v971
    %1063 = vrot.lane.b32.xlu0 %v1060, 104
    %v1064 = vpop.permute.xlu0 %1063
    %v1066 = vmul.f32 %v1059, %v1064
    %1068 = vrot.lane.b32.xlu0 %v1066, 12
    %v1069 = vpop.permute.xlu0 %1068
    %v1071 = vadd.f32 %v1061, %v1069
    %v1072 = vtanh.pop %v1071
    %1074 = vrot.lane.b32.xlu0 %v1072, 24
    %v1075 = vpop.permute.xlu0 %1074
    %v1077 = vmul.f32 %v1059, %v1075
    %1079 = vrot.lane.b32.xlu0 %v977, 104
    %v1080 = vpop.permute.xlu0 %1079
    %1083 = vrot.lane.b32.xlu0 %v1077, 116
    %v1084 = vpop.permute.xlu0 %1083
    %v1086 = vsel %vm776, %v880, %v1080
    %vm1087 = vcmask 195584
    %v1088 = vsel %vm1087, %v1086, %v1084
    %v1089 = vld [vmem:[%s7] sm:$0xff]
    %v1090 = vld [vmem:[%s7 + $0x8] sm:$0xff]
    %v1091 = vld [vmem:[%s7 + $0x10] sm:$0xff]
    %v1092 = vld [vmem:[%s7 + $0x18] sm:$0xff]
    %v1093 = vld [vmem:[%s7 + $0x20] sm:$0xf]
    %v1094 = vld [vmem:[%s8] sm:$0x1]
    %v1096 = vlaneseq
    %v1097 = vshrl.u32 %v1096, 7
    %v1098 = vsub.s32 0, %v1097
    %v1099 = vrot.slane %v1094, %v1098
    %vm1101 = vcmask 293888
    %v1103 = vsel %vm1101, %v1088, 0
    %v1106 = vsel %vm779, %v1093, 0
    %1108 = vmatprep.subr.mxu0 0.0
    %1109 = vmatpush1.msra.mxu0 %v1089
    %1110 = vmatprep.subr.mxu0 0.0
    %1111 = vmatpush1.msra.mxu0 %v1090
    %1112 = vmatprep.subr.mxu0 0.0
    %1113 = vmatpush1.msra.mxu0 %v1091
    %1114 = vmatprep.subr.mxu0 0.0
    %1115 = vmatpush1.msra.mxu0 %v1092
    %1116 = vmatprep.subr.mxu0 0.0
    %1117 = vmatpush1.msra.mxu0 %v1106
    %1118 = vmatprep.subr.mxu0 0.0
    %1119 = vmatpush1.msra.mxu0 0.0
    %1120 = vmatprep.subr.mxu0 0.0
    %1121 = vmatpush1.msra.mxu0 0.0
    %1122 = vmatprep.subr.mxu0 0.0
    %1123 = vmatpush1.msra.mxu0 0.0
    %1124 = vmatprep.subr.mxu0 0.0
    %1125 = vmatpush1.msra.mxu0 0.0
    %1126 = vmatprep.subr.mxu0 0.0
    %1127 = vmatpush1.msra.mxu0 0.0
    %1128 = vmatprep.subr.mxu0 0.0
    %1129 = vmatpush1.msra.mxu0 0.0
    %1130 = vmatprep.subr.mxu0 0.0
    %1131 = vmatpush1.msra.mxu0 0.0
    %1132 = vmatprep.subr.mxu0 0.0
    %1133 = vmatpush1.msra.mxu0 0.0
    %1134 = vmatprep.subr.mxu0 0.0
    %1135 = vmatpush1.msra.mxu0 0.0
    %1136 = vmatprep.subr.mxu0 0.0
    %1137 = vmatpush1.msra.mxu0 0.0
    %1138 = vmatprep.subr.mxu0 0.0
    %1139 = vmatpush1.msra.mxu0 0.0
    %1140 = vmatprep.subr.mxu0 0.0
    %1141 = vmatpush1.msra.mxu0 0.0
    %1142 = vmatprep.subr.mxu0 0.0
    %1143 = vmatpush1.msra.mxu0 0.0
    %1144 = vmatprep.subr.mxu0 0.0
    %1145 = vmatpush1.msra.mxu0 0.0
    %1146 = vmatprep.subr.mxu0 0.0
    %1147 = vmatpush1.msra.mxu0 0.0
    %1148 = vmatprep.subr.mxu0 0.0
    %1149 = vmatpush1.msra.mxu0 0.0
    %1150 = vmatprep.subr.mxu0 0.0
    %1151 = vmatpush1.msra.mxu0 0.0
    %1152 = vmatprep.subr.mxu0 0.0
    %1153 = vmatpush1.msra.mxu0 0.0
    %1154 = vmatprep.subr.mxu0 0.0
    %1155 = vmatpush1.msra.mxu0 0.0
    %1156 = vmatprep.subr.mxu0 0.0
    %1157 = vmatpush1.msra.mxu0 0.0
    %1158 = vmatprep.subr.mxu0 0.0
    %1159 = vmatpush1.msra.mxu0 0.0
    %1160 = vmatprep.subr.mxu0 0.0
    %1161 = vmatpush1.msra.mxu0 0.0
    %1162 = vmatprep.subr.mxu0 0.0
    %1163 = vmatpush1.msra.mxu0 0.0
    %1164 = vmatprep.subr.mxu0 0.0
    %1165 = vmatpush1.msra.mxu0 0.0
    %1166 = vmatprep.subr.mxu0 0.0
    %1167 = vmatpush1.msra.mxu0 0.0
    %1168 = vmatprep.subr.mxu0 0.0
    %1169 = vmatpush1.msra.mxu0 0.0
    %1170 = vmatprep.subr.mxu0 0.0
    %1171 = vmatpush1.msra.mxu0 0.0
    %1172 = vmatprep.mubr.f32.mxu0 0.0
    %1173 = vmatmul.mubr.f32.gmra.mrb[0].mxu0 %v1103
    %v1174 = vpop.f32.mrb[0].mxu0
    %v1175 = vadd.f32 %v1099, %v1174
    %v1176 = vpop.f32.mrb[0].mxu0
    %1177 = vdwg.mxu0
    %vm1178 = vcmask 146432
    %1179 = vst.msk [vmem:[#allocation2] sm:$0xff] %vm1178, %v1175
    // Predicated region
    $region38: #{tpu_custom_call.1} parent=1 // pred_check
      _
    $region39: #{tpu_custom_call.1} parent=1 // pred_check_branch
      %1181 = sbr.rel (0) target = $region41
    $region40: #{tpu_custom_call.1} parent=1 // pred_region
      %s1183 = ssub.s32 128, 128
      %1184 = vsyncadd [#allocation3], %s1183
      %s1186 = sshll.u32 [#allocation2], 4
      %s1187 = int_to_ptr.vmem [resolvable:$true] %s1186
      %1189 = dma.vmem_to_hbm [thread:$0]  %s1187, 128, %s9, [#allocation3]
    $region41: #{tpu_custom_call.1} parent=1 // pred_fallthru
      _
    // Predicated region
    $region42: #{tpu_custom_call.1} parent=1 // pred_check
      _
    $region43: #{tpu_custom_call.1} parent=1 // pred_check_branch
      %1191 = sbr.rel (0) target = $region45
    $region44: #{tpu_custom_call.1} parent=1 // pred_region
      %1192 = dma.done [#allocation3], 128
    $region45: #{tpu_custom_call.1} parent=1 // pred_fallthru
      _
    %1193 = vsyncpa [#allocation3], 1

</llo_original>
